<compile_context>
chip_gen: v7x
topology: tpu7x:2x2x1
jax: 0.10.0
libtpu: 0.0.40
codegen_flags: <defaults>
</compile_context>

<pallas_src>
import jax
import jax.numpy as jnp
from jax import lax
from jax.experimental import pallas as pl
from jax.experimental.pallas import tpu as pltpu

HIDDEN = 64   # hardcoded in the PyTorch module's forward (h0/c0 zeros(.,.,64))
LANE = 128    # TPU lane width; per-gate padded column width


def trend_lstm_kernel(x_ref, w_ih_ref, w_hh_ref, b_ref, fc_w_ref, fc_b_ref,
                      out_ref, *scratch):
    # x_ref:    (T, B, I)    time-major input sequence (f32)
    # w_ih_ref: (I, 4*HP)    input->gates, lane-aligned gate order [i,f,o,g] (f32)
    # w_hh_ref: (H, 4*HP)    hidden->gates, K unpadded (=64), bf16 for the MXU
    # b_ref:    (1, 4*HP)    b_ih + b_hh, lane-aligned (f32)
    # fc_w_ref: (O, H)       final linear weight (PyTorch layout, f32)
    # fc_b_ref: (1, O)       final linear bias (f32)
    # out_ref:  (B, O)
    # scratch:  () when I == 1, else (gx_ref,) with gx_ref (T, B, 4*HP) VMEM
    T, B, I = x_ref.shape
    H, HP4 = w_hh_ref.shape
    HP = HP4 // 4                      # padded per-gate lane width (= LANE)

    w_hh = w_hh_ref[...]               # (H, 4*HP) bf16, loop-invariant
    b = b_ref[...]                     # (1, 4*HP) f32

    if scratch:
        # I > 1: hoist the input projection once into VMEM scratch
        # (T tiny matmuls -> one big one).
        gx_ref, = scratch
        gx_ref[...] = lax.dot_general(x_ref[...], w_ih_ref[...],
                                      (((2,), (0,)), ((), ())),
                                      preferred_element_type=jnp.float32) + b

        def gates_x(t):
            return gx_ref[t]                                   # (B, 4*HP)
    else:
        # I == 1: fuse x_t * w_ih + b into the step body (no scratch).
        # Broadcasts are hoisted out of the loop (JAX does not CSE
        # broadcast_in_dim).
        w_ih_b = jnp.broadcast_to(w_ih_ref[...], (B, HP4))     # (B, 4*HP)
        b_b = jnp.broadcast_to(b, (B, HP4))                    # (B, 4*HP)

        def gates_x(t):
            return x_ref[t] * w_ih_b + b_b                     # (B, 4*HP)

    h0 = jnp.zeros((B, H), jnp.float32)
    c0 = jnp.zeros((B, H), jnp.float32)

    def step(t, carry):
        h, c = carry
        # One (B,H)x(H,4*HP) bf16 MXU matmul per step; f32 accumulation.
        gates = gates_x(t) + jnp.dot(h.astype(w_hh.dtype), w_hh,
                                     preferred_element_type=jnp.float32)
        # Gate layout [i | f | o | g], each HP lanes wide; the real values sit
        # in lanes 0..H-1 of each slot, so every slice below starts on a vreg
        # boundary and is free.
        i_g = jax.nn.sigmoid(gates[:, 0 * HP:0 * HP + H])
        f_g = jax.nn.sigmoid(gates[:, 1 * HP:1 * HP + H])
        g_g = jnp.tanh(gates[:, 3 * HP:3 * HP + H])
        c_new = f_g * c + i_g * g_g
        # o's sigmoid issued last so its EUP latency overlaps c_new -> tanh.
        o_g = jax.nn.sigmoid(gates[:, 2 * HP:2 * HP + H])
        h_new = o_g * jnp.tanh(c_new)
        return h_new, c_new

    unroll = True if T <= 16 else 8
    h_last, _ = lax.fori_loop(0, T, step, (h0, c0), unroll=unroll)

    # ---- fc(out[:, -1, :]) epilogue ----
    fc_w = fc_w_ref[...]               # (O, H)
    if fc_w.shape[0] == 1:
        # output_size == 1: VPU multiply + lane reduce, no degenerate MXU pass.
        y = jnp.sum(h_last * fc_w, axis=-1, keepdims=True)           # (B, 1)
    else:
        y = lax.dot_general(h_last, fc_w, (((1,), (1,)), ((), ())),
                            preferred_element_type=jnp.float32)      # (B, O)
    out_ref[...] = (y + fc_b_ref[...]).astype(out_ref.dtype)


def init_params(key, input_size=1, hidden_size=HIDDEN, output_size=1):
    """Deterministic init matching the PyTorch module's parameter shapes
    (uniform(-1/sqrt(H), 1/sqrt(H))), in 'natural' transposed layout with
    PyTorch gate order [i, f, g, o]."""
    k = 1.0 / float(jnp.sqrt(jnp.float32(hidden_size)))
    ks = jax.random.split(key, 6)
    u = lambda kk, shape: jax.random.uniform(
        kk, shape, minval=-k, maxval=k, dtype=jnp.float32)
    w_ih = u(ks[0], (input_size, 4 * hidden_size))     # PyTorch: (4H, I)^T
    w_hh = u(ks[1], (hidden_size, 4 * hidden_size))    # PyTorch: (4H, H)^T
    b_ih = u(ks[2], (4 * hidden_size,))
    b_hh = u(ks[3], (4 * hidden_size,))
    b = (b_ih + b_hh).reshape(1, 4 * hidden_size)      # only ever used summed
    fc_w = u(ks[4], (hidden_size, output_size))        # PyTorch: (O, H)^T
    fc_b = u(ks[5], (1, output_size))
    return w_ih, w_hh, b, fc_w, fc_b


def pack_params(w_ih, w_hh, b, fc_w, fc_b):
    """Re-pack natural-layout params ([i,f,g,o], width H per gate) into the
    kernel layout: gate order [i,f,o,g], each gate's columns zero-padded
    H -> HP (lane-aligned); w_hh keeps its true K width H and is cast to bf16
    for the MXU; fc_w is transposed to (O, H) (no padding needed)."""
    H = w_hh.shape[0]
    HP = ((H + LANE - 1) // LANE) * LANE

    def split(m):  # (..., 4H) -> per-gate (..., H)
        return {"i": m[..., 0 * H:1 * H], "f": m[..., 1 * H:2 * H],
                "g": m[..., 2 * H:3 * H], "o": m[..., 3 * H:4 * H]}

    def pad_lane(m):  # (..., H) -> (..., HP)
        pad = [(0, 0)] * (m.ndim - 1) + [(0, HP - H)]
        return jnp.pad(m, pad)

    def repack(m):  # (..., 4H) -> (..., 4*HP) in order [i, f, o, g]
        g = split(m)
        return jnp.concatenate(
            [pad_lane(g["i"]), pad_lane(g["f"]), pad_lane(g["o"]),
             pad_lane(g["g"])], axis=-1)

    w_ih_p = repack(w_ih)                                  # (I, 4HP)  f32
    w_hh_p = repack(w_hh).astype(jnp.bfloat16)             # (H, 4HP)  bf16
    b_p = repack(b)                                        # (1, 4HP)  f32
    fc_w_p = jnp.transpose(fc_w)                           # (O, H)    f32
    return w_ih_p, w_hh_p, b_p, fc_w_p, fc_b


def trend_lstm_forward(x, params):
    """x: (B, T, I) batch-first, like the PyTorch module. Returns (B, O)."""
    B, T, I = x.shape
    w_ih, w_hh, b, fc_w, fc_b = params
    O = fc_w.shape[1]

    w_ih_p, w_hh_p, b_p, fc_w_p, fc_b_p = pack_params(w_ih, w_hh, b, fc_w, fc_b)
    hp4 = w_ih_p.shape[1]                                     # 4 * HP
    x_tm = jnp.transpose(x, (1, 0, 2)).astype(jnp.float32)    # (T, B, I)

    # gx scratch only when I > 1; the I == 1 path fuses the input projection
    # into the recurrence and needs no scratch.  For very long T, chunk T or
    # set pltpu.CompilerParams(vmem_limit_bytes=...) -- unnecessary here.
    scratch_shapes = [] if I == 1 else [pltpu.VMEM((T, B, hp4), jnp.float32)]

    vmem = pl.BlockSpec(memory_space=pltpu.MemorySpace.VMEM)
    return pl.pallas_call(
        trend_lstm_kernel,
        out_shape=jax.ShapeDtypeStruct((B, O), jnp.float32),
        in_specs=[vmem] * 6,
        out_specs=vmem,
        scratch_shapes=scratch_shapes,
    )(x_tm, w_ih_p, w_hh_p, b_p, fc_w_p, fc_b_p)


def _reference_forward(x, params):
    """Pure-JAX f32 reference (lax.scan LSTM, natural layout) for correctness."""
    w_ih, w_hh, b, fc_w, fc_b = params
    B = x.shape[0]
    H = w_hh.shape[0]

    def step(carry, x_t):
        h, c = carry
        gates = x_t @ w_ih + h @ w_hh + b[0]
        i_g = jax.nn.sigmoid(gates[:, 0 * H:1 * H])
        f_g = jax.nn.sigmoid(gates[:, 1 * H:2 * H])
        g_g = jnp.tanh(gates[:, 2 * H:3 * H])
        o_g = jax.nn.sigmoid(gates[:, 3 * H:4 * H])
        c = f_g * c + i_g * g_g
        h = o_g * jnp.tanh(c)
        return (h, c), None

    h0 = jnp.zeros((B, H), jnp.float32)
    c0 = jnp.zeros((B, H), jnp.float32)
    (h_last, _), _ = lax.scan(step, (h0, c0),
                              jnp.transpose(x, (1, 0, 2)).astype(jnp.float32))
    return h_last @ fc_w + fc_b


if __name__ == "__main__":
    key = jax.random.PRNGKey(0)
    k_param, k_x = jax.random.split(key)

    B, T, I = 8, 8, 1          # small shapes consistent with the module
    params = init_params(k_param, input_size=I, hidden_size=HIDDEN,
                         output_size=1)
    x = jax.random.normal(k_x, (B, T, I), dtype=jnp.float32)

    out = trend_lstm_forward(x, params)
    out = jax.block_until_ready(out)

    ref = _reference_forward(x, params)
    assert out.shape == (B, 1)
    # bf16 MXU operands vs the pure-f32 reference: tolerance loosened per the
    # perf review (expected error ~1e-3, bound 2e-2).
    assert jnp.allclose(out, ref, atol=2e-2, rtol=2e-2), (out, ref)

    print("KERNEL_OK")
</pallas_src>

<mosaic_0001>
module attributes {stable_mosaic.version = 11 : i64} {
  func.func @trend_lstm_kernel(%arg0: memref<8x8x1xf32, #tpu.memory_space<vmem>>, %arg1: memref<1x512xf32, #tpu.memory_space<vmem>>, %arg2: memref<64x512xbf16, #tpu.memory_space<vmem>>, %arg3: memref<1x512xf32, #tpu.memory_space<vmem>>, %arg4: memref<1x64xf32, #tpu.memory_space<vmem>>, %arg5: memref<1x1xf32, #tpu.memory_space<vmem>>, %arg6: memref<8x1xf32, #tpu.memory_space<vmem>>) attributes {dimension_semantics = [], scalar_prefetch = 0 : i64, scratch_operands = 0 : i64, tpu.core_type = #tpu.core_type<tc>} {
    %c0 = arith.constant 0 : index
    %c0_0 = arith.constant 0 : index
    %0 = vector.load %arg2[%c0, %c0_0] : memref<64x512xbf16, #tpu.memory_space<vmem>>, vector<64x512xbf16>
    %c0_1 = arith.constant 0 : index
    %c0_2 = arith.constant 0 : index
    %1 = vector.load %arg3[%c0_1, %c0_2] : memref<1x512xf32, #tpu.memory_space<vmem>>, vector<1x512xf32>
    %c0_3 = arith.constant 0 : index
    %c0_4 = arith.constant 0 : index
    %2 = vector.load %arg1[%c0_3, %c0_4] : memref<1x512xf32, #tpu.memory_space<vmem>>, vector<1x512xf32>
    %3 = vector.shape_cast %2 : vector<1x512xf32> to vector<1x512xf32>
    %4 = vector.broadcast %3 : vector<1x512xf32> to vector<8x512xf32>
    %5 = vector.shape_cast %1 : vector<1x512xf32> to vector<1x512xf32>
    %6 = vector.broadcast %5 : vector<1x512xf32> to vector<8x512xf32>
    %cst = arith.constant 0.000000e+00 : f32
    %7 = vector.broadcast %cst : f32 to vector<8x64xf32>
    %cst_5 = arith.constant 0.000000e+00 : f32
    %8 = vector.broadcast %cst_5 : f32 to vector<8x64xf32>
    %c0_i32 = arith.constant 0 : i32
    %9 = arith.index_cast %c0_i32 : i32 to index
    %c0_6 = arith.constant 0 : index
    %c0_7 = arith.constant 0 : index
    %10 = vector.load %arg0[%9, %c0_6, %c0_7] : memref<8x8x1xf32, #tpu.memory_space<vmem>>, vector<1x8x1xf32>
    %11 = vector.shape_cast %10 : vector<1x8x1xf32> to vector<8x1xf32>
    %12 = vector.broadcast %11 : vector<8x1xf32> to vector<8x512xf32>
    %13 = arith.mulf %12, %4 : vector<8x512xf32>
    %14 = arith.addf %13, %6 : vector<8x512xf32>
    %15 = arith.truncf %7 : vector<8x64xf32> to vector<8x64xbf16>
    %cst_8 = arith.constant dense<0.000000e+00> : vector<8x512xf32>
    %16 = tpu.matmul %15, %0, %cst_8 {dimension_numbers = #tpu.dot_dimension_numbers<[1], [0], [0], [1], [0, 0, 1, 1], [], []>} : vector<8x64xbf16>, vector<64x512xbf16>, vector<8x512xf32> -> vector<8x512xf32>
    %17 = arith.addf %14, %16 : vector<8x512xf32>
    %18 = vector.extract_strided_slice %17 {offsets = [0, 0], sizes = [8, 64], strides = [1, 1]} : vector<8x512xf32> to vector<8x64xf32>
    %19 = arith.negf %18 : vector<8x64xf32>
    %20 = math.exp %19 : vector<8x64xf32>
    %cst_9 = arith.constant 1.000000e+00 : f32
    %21 = vector.broadcast %cst_9 : f32 to vector<8x64xf32>
    %22 = arith.addf %21, %20 : vector<8x64xf32>
    %23 = arith.divf %21, %22 : vector<8x64xf32>
    %24 = vector.extract_strided_slice %17 {offsets = [0, 128], sizes = [8, 64], strides = [1, 1]} : vector<8x512xf32> to vector<8x64xf32>
    %25 = arith.negf %24 : vector<8x64xf32>
    %26 = math.exp %25 : vector<8x64xf32>
    %cst_10 = arith.constant 1.000000e+00 : f32
    %27 = vector.broadcast %cst_10 : f32 to vector<8x64xf32>
    %28 = arith.addf %27, %26 : vector<8x64xf32>
    %29 = arith.divf %27, %28 : vector<8x64xf32>
    %30 = vector.extract_strided_slice %17 {offsets = [0, 384], sizes = [8, 64], strides = [1, 1]} : vector<8x512xf32> to vector<8x64xf32>
    %31 = math.tanh %30 : vector<8x64xf32>
    %32 = arith.mulf %29, %8 : vector<8x64xf32>
    %33 = arith.mulf %23, %31 : vector<8x64xf32>
    %34 = arith.addf %32, %33 : vector<8x64xf32>
    %35 = vector.extract_strided_slice %17 {offsets = [0, 256], sizes = [8, 64], strides = [1, 1]} : vector<8x512xf32> to vector<8x64xf32>
    %36 = arith.negf %35 : vector<8x64xf32>
    %37 = math.exp %36 : vector<8x64xf32>
    %cst_11 = arith.constant 1.000000e+00 : f32
    %38 = vector.broadcast %cst_11 : f32 to vector<8x64xf32>
    %39 = arith.addf %38, %37 : vector<8x64xf32>
    %40 = arith.divf %38, %39 : vector<8x64xf32>
    %41 = math.tanh %34 : vector<8x64xf32>
    %42 = arith.mulf %40, %41 : vector<8x64xf32>
    %c1_i32 = arith.constant 1 : i32
    %43 = arith.index_cast %c1_i32 : i32 to index
    %c0_12 = arith.constant 0 : index
    %c0_13 = arith.constant 0 : index
    %44 = vector.load %arg0[%43, %c0_12, %c0_13] : memref<8x8x1xf32, #tpu.memory_space<vmem>>, vector<1x8x1xf32>
    %45 = vector.shape_cast %44 : vector<1x8x1xf32> to vector<8x1xf32>
    %46 = vector.broadcast %45 : vector<8x1xf32> to vector<8x512xf32>
    %47 = arith.mulf %46, %4 : vector<8x512xf32>
    %48 = arith.addf %47, %6 : vector<8x512xf32>
    %49 = arith.truncf %42 : vector<8x64xf32> to vector<8x64xbf16>
    %cst_14 = arith.constant dense<0.000000e+00> : vector<8x512xf32>
    %50 = tpu.matmul %49, %0, %cst_14 {dimension_numbers = #tpu.dot_dimension_numbers<[1], [0], [0], [1], [0, 0, 1, 1], [], []>} : vector<8x64xbf16>, vector<64x512xbf16>, vector<8x512xf32> -> vector<8x512xf32>
    %51 = arith.addf %48, %50 : vector<8x512xf32>
    %52 = vector.extract_strided_slice %51 {offsets = [0, 0], sizes = [8, 64], strides = [1, 1]} : vector<8x512xf32> to vector<8x64xf32>
    %53 = arith.negf %52 : vector<8x64xf32>
    %54 = math.exp %53 : vector<8x64xf32>
    %cst_15 = arith.constant 1.000000e+00 : f32
    %55 = vector.broadcast %cst_15 : f32 to vector<8x64xf32>
    %56 = arith.addf %55, %54 : vector<8x64xf32>
    %57 = arith.divf %55, %56 : vector<8x64xf32>
    %58 = vector.extract_strided_slice %51 {offsets = [0, 128], sizes = [8, 64], strides = [1, 1]} : vector<8x512xf32> to vector<8x64xf32>
    %59 = arith.negf %58 : vector<8x64xf32>
    %60 = math.exp %59 : vector<8x64xf32>
    %cst_16 = arith.constant 1.000000e+00 : f32
    %61 = vector.broadcast %cst_16 : f32 to vector<8x64xf32>
    %62 = arith.addf %61, %60 : vector<8x64xf32>
    %63 = arith.divf %61, %62 : vector<8x64xf32>
    %64 = vector.extract_strided_slice %51 {offsets = [0, 384], sizes = [8, 64], strides = [1, 1]} : vector<8x512xf32> to vector<8x64xf32>
    %65 = math.tanh %64 : vector<8x64xf32>
    %66 = arith.mulf %63, %34 : vector<8x64xf32>
    %67 = arith.mulf %57, %65 : vector<8x64xf32>
    %68 = arith.addf %66, %67 : vector<8x64xf32>
    %69 = vector.extract_strided_slice %51 {offsets = [0, 256], sizes = [8, 64], strides = [1, 1]} : vector<8x512xf32> to vector<8x64xf32>
    %70 = arith.negf %69 : vector<8x64xf32>
    %71 = math.exp %70 : vector<8x64xf32>
    %cst_17 = arith.constant 1.000000e+00 : f32
    %72 = vector.broadcast %cst_17 : f32 to vector<8x64xf32>
    %73 = arith.addf %72, %71 : vector<8x64xf32>
    %74 = arith.divf %72, %73 : vector<8x64xf32>
    %75 = math.tanh %68 : vector<8x64xf32>
    %76 = arith.mulf %74, %75 : vector<8x64xf32>
    %c2_i32 = arith.constant 2 : i32
    %77 = arith.index_cast %c2_i32 : i32 to index
    %c0_18 = arith.constant 0 : index
    %c0_19 = arith.constant 0 : index
    %78 = vector.load %arg0[%77, %c0_18, %c0_19] : memref<8x8x1xf32, #tpu.memory_space<vmem>>, vector<1x8x1xf32>
    %79 = vector.shape_cast %78 : vector<1x8x1xf32> to vector<8x1xf32>
    %80 = vector.broadcast %79 : vector<8x1xf32> to vector<8x512xf32>
    %81 = arith.mulf %80, %4 : vector<8x512xf32>
    %82 = arith.addf %81, %6 : vector<8x512xf32>
    %83 = arith.truncf %76 : vector<8x64xf32> to vector<8x64xbf16>
    %cst_20 = arith.constant dense<0.000000e+00> : vector<8x512xf32>
    %84 = tpu.matmul %83, %0, %cst_20 {dimension_numbers = #tpu.dot_dimension_numbers<[1], [0], [0], [1], [0, 0, 1, 1], [], []>} : vector<8x64xbf16>, vector<64x512xbf16>, vector<8x512xf32> -> vector<8x512xf32>
    %85 = arith.addf %82, %84 : vector<8x512xf32>
    %86 = vector.extract_strided_slice %85 {offsets = [0, 0], sizes = [8, 64], strides = [1, 1]} : vector<8x512xf32> to vector<8x64xf32>
    %87 = arith.negf %86 : vector<8x64xf32>
    %88 = math.exp %87 : vector<8x64xf32>
    %cst_21 = arith.constant 1.000000e+00 : f32
    %89 = vector.broadcast %cst_21 : f32 to vector<8x64xf32>
    %90 = arith.addf %89, %88 : vector<8x64xf32>
    %91 = arith.divf %89, %90 : vector<8x64xf32>
    %92 = vector.extract_strided_slice %85 {offsets = [0, 128], sizes = [8, 64], strides = [1, 1]} : vector<8x512xf32> to vector<8x64xf32>
    %93 = arith.negf %92 : vector<8x64xf32>
    %94 = math.exp %93 : vector<8x64xf32>
    %cst_22 = arith.constant 1.000000e+00 : f32
    %95 = vector.broadcast %cst_22 : f32 to vector<8x64xf32>
    %96 = arith.addf %95, %94 : vector<8x64xf32>
    %97 = arith.divf %95, %96 : vector<8x64xf32>
    %98 = vector.extract_strided_slice %85 {offsets = [0, 384], sizes = [8, 64], strides = [1, 1]} : vector<8x512xf32> to vector<8x64xf32>
    %99 = math.tanh %98 : vector<8x64xf32>
    %100 = arith.mulf %97, %68 : vector<8x64xf32>
    %101 = arith.mulf %91, %99 : vector<8x64xf32>
    %102 = arith.addf %100, %101 : vector<8x64xf32>
    %103 = vector.extract_strided_slice %85 {offsets = [0, 256], sizes = [8, 64], strides = [1, 1]} : vector<8x512xf32> to vector<8x64xf32>
    %104 = arith.negf %103 : vector<8x64xf32>
    %105 = math.exp %104 : vector<8x64xf32>
    %cst_23 = arith.constant 1.000000e+00 : f32
    %106 = vector.broadcast %cst_23 : f32 to vector<8x64xf32>
    %107 = arith.addf %106, %105 : vector<8x64xf32>
    %108 = arith.divf %106, %107 : vector<8x64xf32>
    %109 = math.tanh %102 : vector<8x64xf32>
    %110 = arith.mulf %108, %109 : vector<8x64xf32>
    %c3_i32 = arith.constant 3 : i32
    %111 = arith.index_cast %c3_i32 : i32 to index
    %c0_24 = arith.constant 0 : index
    %c0_25 = arith.constant 0 : index
    %112 = vector.load %arg0[%111, %c0_24, %c0_25] : memref<8x8x1xf32, #tpu.memory_space<vmem>>, vector<1x8x1xf32>
    %113 = vector.shape_cast %112 : vector<1x8x1xf32> to vector<8x1xf32>
    %114 = vector.broadcast %113 : vector<8x1xf32> to vector<8x512xf32>
    %115 = arith.mulf %114, %4 : vector<8x512xf32>
    %116 = arith.addf %115, %6 : vector<8x512xf32>
    %117 = arith.truncf %110 : vector<8x64xf32> to vector<8x64xbf16>
    %cst_26 = arith.constant dense<0.000000e+00> : vector<8x512xf32>
    %118 = tpu.matmul %117, %0, %cst_26 {dimension_numbers = #tpu.dot_dimension_numbers<[1], [0], [0], [1], [0, 0, 1, 1], [], []>} : vector<8x64xbf16>, vector<64x512xbf16>, vector<8x512xf32> -> vector<8x512xf32>
    %119 = arith.addf %116, %118 : vector<8x512xf32>
    %120 = vector.extract_strided_slice %119 {offsets = [0, 0], sizes = [8, 64], strides = [1, 1]} : vector<8x512xf32> to vector<8x64xf32>
    %121 = arith.negf %120 : vector<8x64xf32>
    %122 = math.exp %121 : vector<8x64xf32>
    %cst_27 = arith.constant 1.000000e+00 : f32
    %123 = vector.broadcast %cst_27 : f32 to vector<8x64xf32>
    %124 = arith.addf %123, %122 : vector<8x64xf32>
    %125 = arith.divf %123, %124 : vector<8x64xf32>
    %126 = vector.extract_strided_slice %119 {offsets = [0, 128], sizes = [8, 64], strides = [1, 1]} : vector<8x512xf32> to vector<8x64xf32>
    %127 = arith.negf %126 : vector<8x64xf32>
    %128 = math.exp %127 : vector<8x64xf32>
    %cst_28 = arith.constant 1.000000e+00 : f32
    %129 = vector.broadcast %cst_28 : f32 to vector<8x64xf32>
    %130 = arith.addf %129, %128 : vector<8x64xf32>
    %131 = arith.divf %129, %130 : vector<8x64xf32>
    %132 = vector.extract_strided_slice %119 {offsets = [0, 384], sizes = [8, 64], strides = [1, 1]} : vector<8x512xf32> to vector<8x64xf32>
    %133 = math.tanh %132 : vector<8x64xf32>
    %134 = arith.mulf %131, %102 : vector<8x64xf32>
    %135 = arith.mulf %125, %133 : vector<8x64xf32>
    %136 = arith.addf %134, %135 : vector<8x64xf32>
    %137 = vector.extract_strided_slice %119 {offsets = [0, 256], sizes = [8, 64], strides = [1, 1]} : vector<8x512xf32> to vector<8x64xf32>
    %138 = arith.negf %137 : vector<8x64xf32>
    %139 = math.exp %138 : vector<8x64xf32>
    %cst_29 = arith.constant 1.000000e+00 : f32
    %140 = vector.broadcast %cst_29 : f32 to vector<8x64xf32>
    %141 = arith.addf %140, %139 : vector<8x64xf32>
    %142 = arith.divf %140, %141 : vector<8x64xf32>
    %143 = math.tanh %136 : vector<8x64xf32>
    %144 = arith.mulf %142, %143 : vector<8x64xf32>
    %c4_i32 = arith.constant 4 : i32
    %145 = arith.index_cast %c4_i32 : i32 to index
    %c0_30 = arith.constant 0 : index
    %c0_31 = arith.constant 0 : index
    %146 = vector.load %arg0[%145, %c0_30, %c0_31] : memref<8x8x1xf32, #tpu.memory_space<vmem>>, vector<1x8x1xf32>
    %147 = vector.shape_cast %146 : vector<1x8x1xf32> to vector<8x1xf32>
    %148 = vector.broadcast %147 : vector<8x1xf32> to vector<8x512xf32>
    %149 = arith.mulf %148, %4 : vector<8x512xf32>
    %150 = arith.addf %149, %6 : vector<8x512xf32>
    %151 = arith.truncf %144 : vector<8x64xf32> to vector<8x64xbf16>
    %cst_32 = arith.constant dense<0.000000e+00> : vector<8x512xf32>
    %152 = tpu.matmul %151, %0, %cst_32 {dimension_numbers = #tpu.dot_dimension_numbers<[1], [0], [0], [1], [0, 0, 1, 1], [], []>} : vector<8x64xbf16>, vector<64x512xbf16>, vector<8x512xf32> -> vector<8x512xf32>
    %153 = arith.addf %150, %152 : vector<8x512xf32>
    %154 = vector.extract_strided_slice %153 {offsets = [0, 0], sizes = [8, 64], strides = [1, 1]} : vector<8x512xf32> to vector<8x64xf32>
    %155 = arith.negf %154 : vector<8x64xf32>
    %156 = math.exp %155 : vector<8x64xf32>
    %cst_33 = arith.constant 1.000000e+00 : f32
    %157 = vector.broadcast %cst_33 : f32 to vector<8x64xf32>
    %158 = arith.addf %157, %156 : vector<8x64xf32>
    %159 = arith.divf %157, %158 : vector<8x64xf32>
    %160 = vector.extract_strided_slice %153 {offsets = [0, 128], sizes = [8, 64], strides = [1, 1]} : vector<8x512xf32> to vector<8x64xf32>
    %161 = arith.negf %160 : vector<8x64xf32>
    %162 = math.exp %161 : vector<8x64xf32>
    %cst_34 = arith.constant 1.000000e+00 : f32
    %163 = vector.broadcast %cst_34 : f32 to vector<8x64xf32>
    %164 = arith.addf %163, %162 : vector<8x64xf32>
    %165 = arith.divf %163, %164 : vector<8x64xf32>
    %166 = vector.extract_strided_slice %153 {offsets = [0, 384], sizes = [8, 64], strides = [1, 1]} : vector<8x512xf32> to vector<8x64xf32>
    %167 = math.tanh %166 : vector<8x64xf32>
    %168 = arith.mulf %165, %136 : vector<8x64xf32>
    %169 = arith.mulf %159, %167 : vector<8x64xf32>
    %170 = arith.addf %168, %169 : vector<8x64xf32>
    %171 = vector.extract_strided_slice %153 {offsets = [0, 256], sizes = [8, 64], strides = [1, 1]} : vector<8x512xf32> to vector<8x64xf32>
    %172 = arith.negf %171 : vector<8x64xf32>
    %173 = math.exp %172 : vector<8x64xf32>
    %cst_35 = arith.constant 1.000000e+00 : f32
    %174 = vector.broadcast %cst_35 : f32 to vector<8x64xf32>
    %175 = arith.addf %174, %173 : vector<8x64xf32>
    %176 = arith.divf %174, %175 : vector<8x64xf32>
    %177 = math.tanh %170 : vector<8x64xf32>
    %178 = arith.mulf %176, %177 : vector<8x64xf32>
    %c5_i32 = arith.constant 5 : i32
    %179 = arith.index_cast %c5_i32 : i32 to index
    %c0_36 = arith.constant 0 : index
    %c0_37 = arith.constant 0 : index
    %180 = vector.load %arg0[%179, %c0_36, %c0_37] : memref<8x8x1xf32, #tpu.memory_space<vmem>>, vector<1x8x1xf32>
    %181 = vector.shape_cast %180 : vector<1x8x1xf32> to vector<8x1xf32>
    %182 = vector.broadcast %181 : vector<8x1xf32> to vector<8x512xf32>
    %183 = arith.mulf %182, %4 : vector<8x512xf32>
    %184 = arith.addf %183, %6 : vector<8x512xf32>
    %185 = arith.truncf %178 : vector<8x64xf32> to vector<8x64xbf16>
    %cst_38 = arith.constant dense<0.000000e+00> : vector<8x512xf32>
    %186 = tpu.matmul %185, %0, %cst_38 {dimension_numbers = #tpu.dot_dimension_numbers<[1], [0], [0], [1], [0, 0, 1, 1], [], []>} : vector<8x64xbf16>, vector<64x512xbf16>, vector<8x512xf32> -> vector<8x512xf32>
    %187 = arith.addf %184, %186 : vector<8x512xf32>
    %188 = vector.extract_strided_slice %187 {offsets = [0, 0], sizes = [8, 64], strides = [1, 1]} : vector<8x512xf32> to vector<8x64xf32>
    %189 = arith.negf %188 : vector<8x64xf32>
    %190 = math.exp %189 : vector<8x64xf32>
    %cst_39 = arith.constant 1.000000e+00 : f32
    %191 = vector.broadcast %cst_39 : f32 to vector<8x64xf32>
    %192 = arith.addf %191, %190 : vector<8x64xf32>
    %193 = arith.divf %191, %192 : vector<8x64xf32>
    %194 = vector.extract_strided_slice %187 {offsets = [0, 128], sizes = [8, 64], strides = [1, 1]} : vector<8x512xf32> to vector<8x64xf32>
    %195 = arith.negf %194 : vector<8x64xf32>
    %196 = math.exp %195 : vector<8x64xf32>
    %cst_40 = arith.constant 1.000000e+00 : f32
    %197 = vector.broadcast %cst_40 : f32 to vector<8x64xf32>
    %198 = arith.addf %197, %196 : vector<8x64xf32>
    %199 = arith.divf %197, %198 : vector<8x64xf32>
    %200 = vector.extract_strided_slice %187 {offsets = [0, 384], sizes = [8, 64], strides = [1, 1]} : vector<8x512xf32> to vector<8x64xf32>
    %201 = math.tanh %200 : vector<8x64xf32>
    %202 = arith.mulf %199, %170 : vector<8x64xf32>
    %203 = arith.mulf %193, %201 : vector<8x64xf32>
    %204 = arith.addf %202, %203 : vector<8x64xf32>
    %205 = vector.extract_strided_slice %187 {offsets = [0, 256], sizes = [8, 64], strides = [1, 1]} : vector<8x512xf32> to vector<8x64xf32>
    %206 = arith.negf %205 : vector<8x64xf32>
    %207 = math.exp %206 : vector<8x64xf32>
    %cst_41 = arith.constant 1.000000e+00 : f32
    %208 = vector.broadcast %cst_41 : f32 to vector<8x64xf32>
    %209 = arith.addf %208, %207 : vector<8x64xf32>
    %210 = arith.divf %208, %209 : vector<8x64xf32>
    %211 = math.tanh %204 : vector<8x64xf32>
    %212 = arith.mulf %210, %211 : vector<8x64xf32>
    %c6_i32 = arith.constant 6 : i32
    %213 = arith.index_cast %c6_i32 : i32 to index
    %c0_42 = arith.constant 0 : index
    %c0_43 = arith.constant 0 : index
    %214 = vector.load %arg0[%213, %c0_42, %c0_43] : memref<8x8x1xf32, #tpu.memory_space<vmem>>, vector<1x8x1xf32>
    %215 = vector.shape_cast %214 : vector<1x8x1xf32> to vector<8x1xf32>
    %216 = vector.broadcast %215 : vector<8x1xf32> to vector<8x512xf32>
    %217 = arith.mulf %216, %4 : vector<8x512xf32>
    %218 = arith.addf %217, %6 : vector<8x512xf32>
    %219 = arith.truncf %212 : vector<8x64xf32> to vector<8x64xbf16>
    %cst_44 = arith.constant dense<0.000000e+00> : vector<8x512xf32>
    %220 = tpu.matmul %219, %0, %cst_44 {dimension_numbers = #tpu.dot_dimension_numbers<[1], [0], [0], [1], [0, 0, 1, 1], [], []>} : vector<8x64xbf16>, vector<64x512xbf16>, vector<8x512xf32> -> vector<8x512xf32>
    %221 = arith.addf %218, %220 : vector<8x512xf32>
    %222 = vector.extract_strided_slice %221 {offsets = [0, 0], sizes = [8, 64], strides = [1, 1]} : vector<8x512xf32> to vector<8x64xf32>
    %223 = arith.negf %222 : vector<8x64xf32>
    %224 = math.exp %223 : vector<8x64xf32>
    %cst_45 = arith.constant 1.000000e+00 : f32
    %225 = vector.broadcast %cst_45 : f32 to vector<8x64xf32>
    %226 = arith.addf %225, %224 : vector<8x64xf32>
    %227 = arith.divf %225, %226 : vector<8x64xf32>
    %228 = vector.extract_strided_slice %221 {offsets = [0, 128], sizes = [8, 64], strides = [1, 1]} : vector<8x512xf32> to vector<8x64xf32>
    %229 = arith.negf %228 : vector<8x64xf32>
    %230 = math.exp %229 : vector<8x64xf32>
    %cst_46 = arith.constant 1.000000e+00 : f32
    %231 = vector.broadcast %cst_46 : f32 to vector<8x64xf32>
    %232 = arith.addf %231, %230 : vector<8x64xf32>
    %233 = arith.divf %231, %232 : vector<8x64xf32>
    %234 = vector.extract_strided_slice %221 {offsets = [0, 384], sizes = [8, 64], strides = [1, 1]} : vector<8x512xf32> to vector<8x64xf32>
    %235 = math.tanh %234 : vector<8x64xf32>
    %236 = arith.mulf %233, %204 : vector<8x64xf32>
    %237 = arith.mulf %227, %235 : vector<8x64xf32>
    %238 = arith.addf %236, %237 : vector<8x64xf32>
    %239 = vector.extract_strided_slice %221 {offsets = [0, 256], sizes = [8, 64], strides = [1, 1]} : vector<8x512xf32> to vector<8x64xf32>
    %240 = arith.negf %239 : vector<8x64xf32>
    %241 = math.exp %240 : vector<8x64xf32>
    %cst_47 = arith.constant 1.000000e+00 : f32
    %242 = vector.broadcast %cst_47 : f32 to vector<8x64xf32>
    %243 = arith.addf %242, %241 : vector<8x64xf32>
    %244 = arith.divf %242, %243 : vector<8x64xf32>
    %245 = math.tanh %238 : vector<8x64xf32>
    %246 = arith.mulf %244, %245 : vector<8x64xf32>
    %c7_i32 = arith.constant 7 : i32
    %247 = arith.index_cast %c7_i32 : i32 to index
    %c0_48 = arith.constant 0 : index
    %c0_49 = arith.constant 0 : index
    %248 = vector.load %arg0[%247, %c0_48, %c0_49] : memref<8x8x1xf32, #tpu.memory_space<vmem>>, vector<1x8x1xf32>
    %249 = vector.shape_cast %248 : vector<1x8x1xf32> to vector<8x1xf32>
    %250 = vector.broadcast %249 : vector<8x1xf32> to vector<8x512xf32>
    %251 = arith.mulf %250, %4 : vector<8x512xf32>
    %252 = arith.addf %251, %6 : vector<8x512xf32>
    %253 = arith.truncf %246 : vector<8x64xf32> to vector<8x64xbf16>
    %cst_50 = arith.constant dense<0.000000e+00> : vector<8x512xf32>
    %254 = tpu.matmul %253, %0, %cst_50 {dimension_numbers = #tpu.dot_dimension_numbers<[1], [0], [0], [1], [0, 0, 1, 1], [], []>} : vector<8x64xbf16>, vector<64x512xbf16>, vector<8x512xf32> -> vector<8x512xf32>
    %255 = arith.addf %252, %254 : vector<8x512xf32>
    %256 = vector.extract_strided_slice %255 {offsets = [0, 0], sizes = [8, 64], strides = [1, 1]} : vector<8x512xf32> to vector<8x64xf32>
    %257 = arith.negf %256 : vector<8x64xf32>
    %258 = math.exp %257 : vector<8x64xf32>
    %cst_51 = arith.constant 1.000000e+00 : f32
    %259 = vector.broadcast %cst_51 : f32 to vector<8x64xf32>
    %260 = arith.addf %259, %258 : vector<8x64xf32>
    %261 = arith.divf %259, %260 : vector<8x64xf32>
    %262 = vector.extract_strided_slice %255 {offsets = [0, 128], sizes = [8, 64], strides = [1, 1]} : vector<8x512xf32> to vector<8x64xf32>
    %263 = arith.negf %262 : vector<8x64xf32>
    %264 = math.exp %263 : vector<8x64xf32>
    %cst_52 = arith.constant 1.000000e+00 : f32
    %265 = vector.broadcast %cst_52 : f32 to vector<8x64xf32>
    %266 = arith.addf %265, %264 : vector<8x64xf32>
    %267 = arith.divf %265, %266 : vector<8x64xf32>
    %268 = vector.extract_strided_slice %255 {offsets = [0, 384], sizes = [8, 64], strides = [1, 1]} : vector<8x512xf32> to vector<8x64xf32>
    %269 = math.tanh %268 : vector<8x64xf32>
    %270 = arith.mulf %267, %238 : vector<8x64xf32>
    %271 = arith.mulf %261, %269 : vector<8x64xf32>
    %272 = arith.addf %270, %271 : vector<8x64xf32>
    %273 = vector.extract_strided_slice %255 {offsets = [0, 256], sizes = [8, 64], strides = [1, 1]} : vector<8x512xf32> to vector<8x64xf32>
    %274 = arith.negf %273 : vector<8x64xf32>
    %275 = math.exp %274 : vector<8x64xf32>
    %cst_53 = arith.constant 1.000000e+00 : f32
    %276 = vector.broadcast %cst_53 : f32 to vector<8x64xf32>
    %277 = arith.addf %276, %275 : vector<8x64xf32>
    %278 = arith.divf %276, %277 : vector<8x64xf32>
    %279 = math.tanh %272 : vector<8x64xf32>
    %280 = arith.mulf %278, %279 : vector<8x64xf32>
    %c8_i32 = arith.constant 8 : i32
    %c0_54 = arith.constant 0 : index
    %c0_55 = arith.constant 0 : index
    %281 = vector.load %arg4[%c0_54, %c0_55] : memref<1x64xf32, #tpu.memory_space<vmem>>, vector<1x64xf32>
    %282 = vector.broadcast %281 : vector<1x64xf32> to vector<8x64xf32>
    %283 = arith.mulf %280, %282 : vector<8x64xf32>
    %cst_56 = arith.constant dense<0.000000e+00> : vector<8xf32>
    %284 = vector.multi_reduction <add>, %283, %cst_56 [1] : vector<8x64xf32> to vector<8xf32>
    %285 = vector.shape_cast %284 : vector<8xf32> to vector<8x1xf32>
    %c0_57 = arith.constant 0 : index
    %c0_58 = arith.constant 0 : index
    %286 = vector.load %arg5[%c0_57, %c0_58] : memref<1x1xf32, #tpu.memory_space<vmem>>, vector<1x1xf32>
    %287 = vector.broadcast %286 : vector<1x1xf32> to vector<8x1xf32>
    %288 = arith.addf %285, %287 : vector<8x1xf32>
    %c0_59 = arith.constant 0 : index
    %c0_60 = arith.constant 0 : index
    %289 = vector.load %arg6[%c0_59, %c0_60] : memref<8x1xf32, #tpu.memory_space<vmem>>, vector<8x1xf32>
    tpu.vector_store %arg6[%c0_59, %c0_60], %288 {strides = array<i32>} : memref<8x1xf32, #tpu.memory_space<vmem>>, vector<8x1xf32>,
    return
  }
}

</mosaic_0001>

<llo_original>
// kernel: tpu_custom_call.1
$region0: #{tpu_custom_call.1}
  #allocation0 [shape = 'u32[]', space=smem, size = 0x4, offset = 0x4, fixed_abs, tag = 'smem constant byte address 0x4 - core index']
  #allocation1 [shape = 'u32[144,128]{1,0:T(1,128)}', space=vmem, size = 0x12000, scoped, tag = 'internal scratch']
  #allocation2 [shape = 'f32[1,1]{1,0:T(1,128)S(1)}', space=vmem, size = 0x200, scoped, tag = 'scoped memory for tpu_custom_call.1']
  %s0 = inlined_call_operand.vmem [shape: f32[8,8,1], index: 0, kind: input, shape index: {}]
  %s1 = inlined_call_operand.vmem [shape: f32[1,512], index: 1, kind: input, shape index: {}]
  %s2 = inlined_call_operand.hbm [shape: bf16[64,512], index: 2, kind: input, shape index: {}]
  %s3 = inlined_call_operand.vmem [shape: f32[1,512], index: 3, kind: input, shape index: {}]
  %s4 = inlined_call_operand.vmem [shape: f32[1,64], index: 4, kind: input, shape index: {}]
  %s5 = inlined_call_operand.<no memory space> [shape: f32[1,1], index: 5, kind: input, shape index: {}]
  %s6 = inlined_call_operand.vmem [shape: f32[8,1], index: 6, kind: output, shape index: {}]
  %s7 = sld [smem:[#allocation0]]
  $region38: #{tpu_custom_call.1} parent=0
    _
  %s9 = ssub.s32 1, %s7
  %s10 = scalar_select 0, %s9, %s7
  %v11 = vstv %s5
  %12 = vst [vmem:[#allocation2] sm:$0x1] %v11
  $region1: #{tpu_custom_call.1} parent=0
    #allocation3 [shape = 'u8[65536]{0}', space=vmem, size = 0x10000, scoped, tag = 'input window, operand 2, single buffered']
    #allocation4 [shape = 's32[1]{0}', space=sflag, size = 0x4, scoped, tag = 'scoped memory for tpu_custom_call.1']
    %13 = vsyncpa [#allocation4], 0
    // Predicated region
    $region2: #{tpu_custom_call.1} parent=1 // pred_check
      _
    $region3: #{tpu_custom_call.1} parent=1 // pred_check_branch
      %15 = sbr.rel (0) target = $region5
    $region4: #{tpu_custom_call.1} parent=1 // pred_region
      _
    $region5: #{tpu_custom_call.1} parent=1 // pred_fallthru
      _
    // Predicated region
    $region6: #{tpu_custom_call.1} parent=1 // pred_check
      _
    $region7: #{tpu_custom_call.1} parent=1 // pred_check_branch
      %17 = sbr.rel (0) target = $region9
    $region8: #{tpu_custom_call.1} parent=1 // pred_region
      _
    $region9: #{tpu_custom_call.1} parent=1 // pred_fallthru
      _
    // Predicated region
    $region10: #{tpu_custom_call.1} parent=1 // pred_check
      _
    $region11: #{tpu_custom_call.1} parent=1 // pred_check_branch
      %19 = sbr.rel (0) target = $region13
    $region12: #{tpu_custom_call.1} parent=1 // pred_region
      %s21 = ssub.s32 2048, 2048
      %22 = vsyncadd [#allocation4], %s21
      %s23 = sshll.u32 [#allocation3], 4
      %s24 = int_to_ptr.vmem [resolvable:$true] %s23
      %29 = dma.hbm_to_vmem [thread:$0]  %s2, 2048, %s24, [#allocation4], 256, 256, 16
    $region13: #{tpu_custom_call.1} parent=1 // pred_fallthru
      _
    // Predicated region
    $region14: #{tpu_custom_call.1} parent=1 // pred_check
      _
    $region15: #{tpu_custom_call.1} parent=1 // pred_check_branch
      %31 = sbr.rel (0) target = $region17
    $region16: #{tpu_custom_call.1} parent=1 // pred_region
      _
    $region17: #{tpu_custom_call.1} parent=1 // pred_fallthru
      _
    // Predicated region
    $region18: #{tpu_custom_call.1} parent=1 // pred_check
      _
    $region19: #{tpu_custom_call.1} parent=1 // pred_check_branch
      %33 = sbr.rel (0) target = $region21
    $region20: #{tpu_custom_call.1} parent=1 // pred_region
      _
    $region21: #{tpu_custom_call.1} parent=1 // pred_fallthru
      _
    // Predicated region
    $region22: #{tpu_custom_call.1} parent=1 // pred_check
      _
    $region23: #{tpu_custom_call.1} parent=1 // pred_check_branch
      %35 = sbr.rel (0) target = $region25
    $region24: #{tpu_custom_call.1} parent=1 // pred_region
      _
    $region25: #{tpu_custom_call.1} parent=1 // pred_fallthru
      _
    // Predicated region
    $region26: #{tpu_custom_call.1} parent=1 // pred_check
      _
    $region27: #{tpu_custom_call.1} parent=1 // pred_check_branch
      %37 = sbr.rel (0) target = $region29
    $region28: #{tpu_custom_call.1} parent=1 // pred_region
      %38 = dma.done [#allocation4], 2048
    $region29: #{tpu_custom_call.1} parent=1 // pred_fallthru
      _
    %v40 = vld [vmem:[#allocation3] sm:$0xff]
    %v41 = vld [vmem:[#allocation3 + $0x8] sm:$0xff]
    %v42 = vld [vmem:[#allocation3 + $0x10] sm:$0xff]
    %v43 = vld [vmem:[#allocation3 + $0x18] sm:$0xff]
    %v44 = vld [vmem:[#allocation3 + $0x20] sm:$0xff]
    %v45 = vld [vmem:[#allocation3 + $0x28] sm:$0xff]
    %v46 = vld [vmem:[#allocation3 + $0x30] sm:$0xff]
    %v47 = vld [vmem:[#allocation3 + $0x38] sm:$0xff]
    %v48 = vld [vmem:[#allocation3 + $0x40] sm:$0xff]
    %v49 = vld [vmem:[#allocation3 + $0x48] sm:$0xff]
    %v50 = vld [vmem:[#allocation3 + $0x50] sm:$0xff]
    %v51 = vld [vmem:[#allocation3 + $0x58] sm:$0xff]
    %v52 = vld [vmem:[#allocation3 + $0x60] sm:$0xff]
    %v53 = vld [vmem:[#allocation3 + $0x68] sm:$0xff]
    %v54 = vld [vmem:[#allocation3 + $0x70] sm:$0xff]
    %v55 = vld [vmem:[#allocation3 + $0x78] sm:$0xff]
    %v56 = vld [vmem:[%s3] sm:$0xf]
    %v57 = vld [vmem:[%s1] sm:$0xf]
    %v59 = vlaneseq
    %v60 = vshrl.u32 %v59, 7
    %v61 = vsub.s32 0, %v60
    %v62 = vrot.slane %v57, %v61
    %v63 = vlaneseq
    %v64 = vshrl.u32 %v63, 7
    %v65 = vsub.s32 1, %v64
    %v66 = vrot.slane %v57, %v65
    %v67 = vlaneseq
    %v68 = vshrl.u32 %v67, 7
    %v69 = vsub.s32 2, %v68
    %v70 = vrot.slane %v57, %v69
    %v71 = vlaneseq
    %v72 = vshrl.u32 %v71, 7
    %v73 = vsub.s32 3, %v72
    %v74 = vrot.slane %v57, %v73
    %v80 = vlaneseq
    %v81 = vshrl.u32 %v80, 7
    %v82 = vsub.s32 0, %v81
    %v83 = vrot.slane %v56, %v82
    %v84 = vlaneseq
    %v85 = vshrl.u32 %v84, 7
    %v86 = vsub.s32 1, %v85
    %v87 = vrot.slane %v56, %v86
    %v88 = vlaneseq
    %v89 = vshrl.u32 %v88, 7
    %v90 = vsub.s32 2, %v89
    %v91 = vrot.slane %v56, %v90
    %v92 = vlaneseq
    %v93 = vshrl.u32 %v92, 7
    %v94 = vsub.s32 3, %v93
    %v95 = vrot.slane %v56, %v94
    %v100 = vld [vmem:[%s0] sm:$0xff]
    %102 = vset.pattern.permute.xlu0 0
    %103 = vperm.xlu0 %102, %v100
    %v104 = vpop.permute.xlu0 %103
    %v106 = vmul.f32 %v104, %v62
    %v107 = vmul.f32 %v104, %v66
    %v108 = vmul.f32 %v104, %v70
    %v109 = vmul.f32 %v104, %v74
    %v110 = vadd.f32 %v106, %v83
    %v111 = vadd.f32 %v107, %v87
    %v112 = vadd.f32 %v108, %v91
    %v113 = vadd.f32 %v109, %v95
    %v130 = vunpack.c.l.b16 %v40
    %v131 = vunpack.c.h.b16 %v40
    %v132 = vunpack.c.l.b16 %v41
    %v133 = vunpack.c.h.b16 %v41
    %v134 = vunpack.c.l.b16 %v42
    %v135 = vunpack.c.h.b16 %v42
    %v136 = vunpack.c.l.b16 %v43
    %v137 = vunpack.c.h.b16 %v43
    %v138 = vunpack.c.l.b16 %v44
    %v139 = vunpack.c.h.b16 %v44
    %v140 = vunpack.c.l.b16 %v45
    %v141 = vunpack.c.h.b16 %v45
    %v142 = vunpack.c.l.b16 %v46
    %v143 = vunpack.c.h.b16 %v46
    %v144 = vunpack.c.l.b16 %v47
    %v145 = vunpack.c.h.b16 %v47
    %v146 = vunpack.c.l.b16 %v48
    %v147 = vunpack.c.h.b16 %v48
    %v148 = vunpack.c.l.b16 %v49
    %v149 = vunpack.c.h.b16 %v49
    %v150 = vunpack.c.l.b16 %v50
    %v151 = vunpack.c.h.b16 %v50
    %v152 = vunpack.c.l.b16 %v51
    %v153 = vunpack.c.h.b16 %v51
    %v154 = vunpack.c.l.b16 %v52
    %v155 = vunpack.c.h.b16 %v52
    %v156 = vunpack.c.l.b16 %v53
    %v157 = vunpack.c.h.b16 %v53
    %v158 = vunpack.c.l.b16 %v54
    %v159 = vunpack.c.h.b16 %v54
    %v160 = vunpack.c.l.b16 %v55
    %v161 = vunpack.c.h.b16 %v55
    %v162 = vpack.c.b16 %v134, %v130
    %v163 = vpack.c.b16 %v135, %v131
    %v164 = vpack.c.b16 %v136, %v132
    %v165 = vpack.c.b16 %v137, %v133
    %v166 = vpack.c.b16 %v142, %v138
    %v167 = vpack.c.b16 %v143, %v139
    %v168 = vpack.c.b16 %v144, %v140
    %v169 = vpack.c.b16 %v145, %v141
    %v170 = vpack.c.b16 %v150, %v146
    %v171 = vpack.c.b16 %v151, %v147
    %v172 = vpack.c.b16 %v152, %v148
    %v173 = vpack.c.b16 %v153, %v149
    %v174 = vpack.c.b16 %v158, %v154
    %v175 = vpack.c.b16 %v159, %v155
    %v176 = vpack.c.b16 %v160, %v156
    %v177 = vpack.c.b16 %v161, %v157
    %vm194 = vcmask 523264
    %v196 = vsel %vm194, 0, 0
    %198 = vmatprep.subr.bf16.mxu0 %v163
    %199 = vmatpush1.bf16.msra.mxu0 %v162
    %200 = vmatprep.subr.bf16.mxu0 %v167
    %201 = vmatpush1.bf16.msra.mxu0 %v166
    %202 = vmatprep.subr.bf16.mxu0 %v171
    %203 = vmatpush1.bf16.msra.mxu0 %v170
    %204 = vmatprep.subr.bf16.mxu0 %v175
    %205 = vmatpush1.bf16.msra.mxu0 %v174
    %206 = vmatprep.subr.bf16.mxu0 0
    %207 = vmatpush1.bf16.msra.mxu0 0
    %208 = vmatprep.subr.bf16.mxu0 0
    %209 = vmatpush1.bf16.msra.mxu0 0
    %210 = vmatprep.subr.bf16.mxu0 0
    %211 = vmatpush1.bf16.msra.mxu0 0
    %212 = vmatprep.subr.bf16.mxu0 0
    %213 = vmatpush1.bf16.msra.mxu0 0
    %214 = vmatprep.subr.bf16.mxu0 0
    %215 = vmatpush1.bf16.msra.mxu0 0
    %216 = vmatprep.subr.bf16.mxu0 0
    %217 = vmatpush1.bf16.msra.mxu0 0
    %218 = vmatprep.subr.bf16.mxu0 0
    %219 = vmatpush1.bf16.msra.mxu0 0
    %220 = vmatprep.subr.bf16.mxu0 0
    %221 = vmatpush1.bf16.msra.mxu0 0
    %222 = vmatprep.subr.bf16.mxu0 0
    %223 = vmatpush1.bf16.msra.mxu0 0
    %224 = vmatprep.subr.bf16.mxu0 0
    %225 = vmatpush1.bf16.msra.mxu0 0
    %226 = vmatprep.subr.bf16.mxu0 0
    %227 = vmatpush1.bf16.msra.mxu0 0
    %228 = vmatprep.subr.bf16.mxu0 0
    %229 = vmatpush1.bf16.msra.mxu0 0
    %230 = vmatprep.mubr.bf16.mxu0 0
    %231 = vmatmul.mubr.bf16.gmra.mrb[0].mxu0 %v196
    %v232 = vpop.f32.mrb[0].mxu0
    %v233 = vadd.f32 0.0, %v232
    %v234 = vpop.f32.mrb[0].mxu0
    %v235 = vadd.f32 0.0, %v234
    %v236 = vpop.f32.mrb[0].mxu0
    %v237 = vpop.f32.mrb[0].mxu0
    %238 = vdwg.mxu0
    %239 = vmatprep.subr.bf16.mxu0 %v165
    %240 = vmatpush1.bf16.msra.mxu0 %v164
    %241 = vmatprep.subr.bf16.mxu0 %v169
    %242 = vmatpush1.bf16.msra.mxu0 %v168
    %243 = vmatprep.subr.bf16.mxu0 %v173
    %244 = vmatpush1.bf16.msra.mxu0 %v172
    %245 = vmatprep.subr.bf16.mxu0 %v177
    %246 = vmatpush1.bf16.msra.mxu0 %v176
    %247 = vmatprep.subr.bf16.mxu0 0
    %248 = vmatpush1.bf16.msra.mxu0 0
    %249 = vmatprep.subr.bf16.mxu0 0
    %250 = vmatpush1.bf16.msra.mxu0 0
    %251 = vmatprep.subr.bf16.mxu0 0
    %252 = vmatpush1.bf16.msra.mxu0 0
    %253 = vmatprep.subr.bf16.mxu0 0
    %254 = vmatpush1.bf16.msra.mxu0 0
    %255 = vmatprep.subr.bf16.mxu0 0
    %256 = vmatpush1.bf16.msra.mxu0 0
    %257 = vmatprep.subr.bf16.mxu0 0
    %258 = vmatpush1.bf16.msra.mxu0 0
    %259 = vmatprep.subr.bf16.mxu0 0
    %260 = vmatpush1.bf16.msra.mxu0 0
    %261 = vmatprep.subr.bf16.mxu0 0
    %262 = vmatpush1.bf16.msra.mxu0 0
    %263 = vmatprep.subr.bf16.mxu0 0
    %264 = vmatpush1.bf16.msra.mxu0 0
    %265 = vmatprep.subr.bf16.mxu0 0
    %266 = vmatpush1.bf16.msra.mxu0 0
    %267 = vmatprep.subr.bf16.mxu0 0
    %268 = vmatpush1.bf16.msra.mxu0 0
    %269 = vmatprep.subr.bf16.mxu0 0
    %270 = vmatpush1.bf16.msra.mxu0 0
    %271 = vmatprep.mubr.bf16.mxu0 0
    %272 = vmatmul.mubr.bf16.gmra.mrb[0].mxu0 %v196
    %v273 = vpop.f32.mrb[0].mxu0
    %v274 = vadd.f32 0.0, %v273
    %v275 = vpop.f32.mrb[0].mxu0
    %v276 = vadd.f32 0.0, %v275
    %v277 = vpop.f32.mrb[0].mxu0
    %v278 = vpop.f32.mrb[0].mxu0
    %279 = vdwg.mxu0
    %v280 = vadd.f32 %v110, %v233
    %v281 = vadd.f32 %v111, %v235
    %v282 = vadd.f32 %v112, %v274
    %v283 = vadd.f32 %v113, %v276
    %v284 = vxor.u32 %v280, 2147483648
    %v285 = vmul.f32 %v284, 1.442695
    %v286 = vpow.pop %v285
    %v287 = vadd.f32 %v286, 1.0
    %v288 = vrcp.pop %v287
    %v289 = vmul.f32 1.0, %v288
    %v290 = vxor.u32 %v281, 2147483648
    %v291 = vmul.f32 %v290, 1.442695
    %v292 = vpow.pop %v291
    %v293 = vadd.f32 %v292, 1.0
    %v294 = vrcp.pop %v293
    %v295 = vmul.f32 1.0, %v294
    %v296 = vtanh.pop %v283
    %v297 = vmul.f32 %v295, 0.0
    %v298 = vmul.f32 %v289, %v296
    %v299 = vadd.f32 %v297, %v298
    %v300 = vxor.u32 %v282, 2147483648
    %v301 = vmul.f32 %v300, 1.442695
    %v302 = vpow.pop %v301
    %v303 = vadd.f32 %v302, 1.0
    %v304 = vrcp.pop %v303
    %v305 = vmul.f32 1.0, %v304
    %v306 = vtanh.pop %v299
    %v307 = vmul.f32 %v305, %v306
    %s308 = scalar_lea.vmem %s0, 8
    %v309 = vld [vmem:[%s308] sm:$0xff]
    %311 = vset.pattern.permute.xlu0 0
    %312 = vperm.xlu0 %311, %v309
    %v313 = vpop.permute.xlu0 %312
    %v315 = vmul.f32 %v313, %v62
    %v316 = vmul.f32 %v313, %v66
    %v317 = vmul.f32 %v313, %v70
    %v318 = vmul.f32 %v313, %v74
    %v319 = vadd.f32 %v315, %v83
    %v320 = vadd.f32 %v316, %v87
    %v321 = vadd.f32 %v317, %v91
    %v322 = vadd.f32 %v318, %v95
    %v323 = vpack.c.bf16 %v307, %v307
    %v325 = vsel %vm194, %v323, 0
    %327 = vmatprep.subr.bf16.mxu0 %v163
    %328 = vmatpush1.bf16.msra.mxu0 %v162
    %329 = vmatprep.subr.bf16.mxu0 %v167
    %330 = vmatpush1.bf16.msra.mxu0 %v166
    %331 = vmatprep.subr.bf16.mxu0 %v171
    %332 = vmatpush1.bf16.msra.mxu0 %v170
    %333 = vmatprep.subr.bf16.mxu0 %v175
    %334 = vmatpush1.bf16.msra.mxu0 %v174
    %335 = vmatprep.subr.bf16.mxu0 0
    %336 = vmatpush1.bf16.msra.mxu0 0
    %337 = vmatprep.subr.bf16.mxu0 0
    %338 = vmatpush1.bf16.msra.mxu0 0
    %339 = vmatprep.subr.bf16.mxu0 0
    %340 = vmatpush1.bf16.msra.mxu0 0
    %341 = vmatprep.subr.bf16.mxu0 0
    %342 = vmatpush1.bf16.msra.mxu0 0
    %343 = vmatprep.subr.bf16.mxu0 0
    %344 = vmatpush1.bf16.msra.mxu0 0
    %345 = vmatprep.subr.bf16.mxu0 0
    %346 = vmatpush1.bf16.msra.mxu0 0
    %347 = vmatprep.subr.bf16.mxu0 0
    %348 = vmatpush1.bf16.msra.mxu0 0
    %349 = vmatprep.subr.bf16.mxu0 0
    %350 = vmatpush1.bf16.msra.mxu0 0
    %351 = vmatprep.subr.bf16.mxu0 0
    %352 = vmatpush1.bf16.msra.mxu0 0
    %353 = vmatprep.subr.bf16.mxu0 0
    %354 = vmatpush1.bf16.msra.mxu0 0
    %355 = vmatprep.subr.bf16.mxu0 0
    %356 = vmatpush1.bf16.msra.mxu0 0
    %357 = vmatprep.subr.bf16.mxu0 0
    %358 = vmatpush1.bf16.msra.mxu0 0
    %359 = vmatprep.mubr.bf16.mxu0 0
    %360 = vmatmul.mubr.bf16.gmra.mrb[0].mxu0 %v325
    %v361 = vpop.f32.mrb[0].mxu0
    %v362 = vadd.f32 0.0, %v361
    %v363 = vpop.f32.mrb[0].mxu0
    %v364 = vadd.f32 0.0, %v363
    %v365 = vpop.f32.mrb[0].mxu0
    %v366 = vpop.f32.mrb[0].mxu0
    %367 = vdwg.mxu0
    %368 = vmatprep.subr.bf16.mxu0 %v165
    %369 = vmatpush1.bf16.msra.mxu0 %v164
    %370 = vmatprep.subr.bf16.mxu0 %v169
    %371 = vmatpush1.bf16.msra.mxu0 %v168
    %372 = vmatprep.subr.bf16.mxu0 %v173
    %373 = vmatpush1.bf16.msra.mxu0 %v172
    %374 = vmatprep.subr.bf16.mxu0 %v177
    %375 = vmatpush1.bf16.msra.mxu0 %v176
    %376 = vmatprep.subr.bf16.mxu0 0
    %377 = vmatpush1.bf16.msra.mxu0 0
    %378 = vmatprep.subr.bf16.mxu0 0
    %379 = vmatpush1.bf16.msra.mxu0 0
    %380 = vmatprep.subr.bf16.mxu0 0
    %381 = vmatpush1.bf16.msra.mxu0 0
    %382 = vmatprep.subr.bf16.mxu0 0
    %383 = vmatpush1.bf16.msra.mxu0 0
    %384 = vmatprep.subr.bf16.mxu0 0
    %385 = vmatpush1.bf16.msra.mxu0 0
    %386 = vmatprep.subr.bf16.mxu0 0
    %387 = vmatpush1.bf16.msra.mxu0 0
    %388 = vmatprep.subr.bf16.mxu0 0
    %389 = vmatpush1.bf16.msra.mxu0 0
    %390 = vmatprep.subr.bf16.mxu0 0
    %391 = vmatpush1.bf16.msra.mxu0 0
    %392 = vmatprep.subr.bf16.mxu0 0
    %393 = vmatpush1.bf16.msra.mxu0 0
    %394 = vmatprep.subr.bf16.mxu0 0
    %395 = vmatpush1.bf16.msra.mxu0 0
    %396 = vmatprep.subr.bf16.mxu0 0
    %397 = vmatpush1.bf16.msra.mxu0 0
    %398 = vmatprep.subr.bf16.mxu0 0
    %399 = vmatpush1.bf16.msra.mxu0 0
    %400 = vmatprep.mubr.bf16.mxu0 0
    %401 = vmatmul.mubr.bf16.gmra.mrb[0].mxu0 %v325
    %v402 = vpop.f32.mrb[0].mxu0
    %v403 = vadd.f32 0.0, %v402
    %v404 = vpop.f32.mrb[0].mxu0
    %v405 = vadd.f32 0.0, %v404
    %v406 = vpop.f32.mrb[0].mxu0
    %v407 = vpop.f32.mrb[0].mxu0
    %408 = vdwg.mxu0
    %v409 = vadd.f32 %v319, %v362
    %v410 = vadd.f32 %v320, %v364
    %v411 = vadd.f32 %v321, %v403
    %v412 = vadd.f32 %v322, %v405
    %v413 = vxor.u32 %v409, 2147483648
    %v414 = vmul.f32 %v413, 1.442695
    %v415 = vpow.pop %v414
    %v416 = vadd.f32 %v415, 1.0
    %v417 = vrcp.pop %v416
    %v418 = vmul.f32 1.0, %v417
    %v419 = vxor.u32 %v410, 2147483648
    %v420 = vmul.f32 %v419, 1.442695
    %v421 = vpow.pop %v420
    %v422 = vadd.f32 %v421, 1.0
    %v423 = vrcp.pop %v422
    %v424 = vmul.f32 1.0, %v423
    %v425 = vtanh.pop %v412
    %v426 = vmul.f32 %v424, %v299
    %v427 = vmul.f32 %v418, %v425
    %v428 = vadd.f32 %v426, %v427
    %v429 = vxor.u32 %v411, 2147483648
    %v430 = vmul.f32 %v429, 1.442695
    %v431 = vpow.pop %v430
    %v432 = vadd.f32 %v431, 1.0
    %v433 = vrcp.pop %v432
    %v434 = vmul.f32 1.0, %v433
    %v435 = vtanh.pop %v428
    %v436 = vmul.f32 %v434, %v435
    %s437 = scalar_lea.vmem %s0, 16
    %v438 = vld [vmem:[%s437] sm:$0xff]
    %440 = vset.pattern.permute.xlu0 0
    %441 = vperm.xlu0 %440, %v438
    %v442 = vpop.permute.xlu0 %441
    %v444 = vmul.f32 %v442, %v62
    %v445 = vmul.f32 %v442, %v66
    %v446 = vmul.f32 %v442, %v70
    %v447 = vmul.f32 %v442, %v74
    %v448 = vadd.f32 %v444, %v83
    %v449 = vadd.f32 %v445, %v87
    %v450 = vadd.f32 %v446, %v91
    %v451 = vadd.f32 %v447, %v95
    %v452 = vpack.c.bf16 %v436, %v436
    %v454 = vsel %vm194, %v452, 0
    %456 = vmatprep.subr.bf16.mxu0 %v163
    %457 = vmatpush1.bf16.msra.mxu0 %v162
    %458 = vmatprep.subr.bf16.mxu0 %v167
    %459 = vmatpush1.bf16.msra.mxu0 %v166
    %460 = vmatprep.subr.bf16.mxu0 %v171
    %461 = vmatpush1.bf16.msra.mxu0 %v170
    %462 = vmatprep.subr.bf16.mxu0 %v175
    %463 = vmatpush1.bf16.msra.mxu0 %v174
    %464 = vmatprep.subr.bf16.mxu0 0
    %465 = vmatpush1.bf16.msra.mxu0 0
    %466 = vmatprep.subr.bf16.mxu0 0
    %467 = vmatpush1.bf16.msra.mxu0 0
    %468 = vmatprep.subr.bf16.mxu0 0
    %469 = vmatpush1.bf16.msra.mxu0 0
    %470 = vmatprep.subr.bf16.mxu0 0
    %471 = vmatpush1.bf16.msra.mxu0 0
    %472 = vmatprep.subr.bf16.mxu0 0
    %473 = vmatpush1.bf16.msra.mxu0 0
    %474 = vmatprep.subr.bf16.mxu0 0
    %475 = vmatpush1.bf16.msra.mxu0 0
    %476 = vmatprep.subr.bf16.mxu0 0
    %477 = vmatpush1.bf16.msra.mxu0 0
    %478 = vmatprep.subr.bf16.mxu0 0
    %479 = vmatpush1.bf16.msra.mxu0 0
    %480 = vmatprep.subr.bf16.mxu0 0
    %481 = vmatpush1.bf16.msra.mxu0 0
    %482 = vmatprep.subr.bf16.mxu0 0
    %483 = vmatpush1.bf16.msra.mxu0 0
    %484 = vmatprep.subr.bf16.mxu0 0
    %485 = vmatpush1.bf16.msra.mxu0 0
    %486 = vmatprep.subr.bf16.mxu0 0
    %487 = vmatpush1.bf16.msra.mxu0 0
    %488 = vmatprep.mubr.bf16.mxu0 0
    %489 = vmatmul.mubr.bf16.gmra.mrb[0].mxu0 %v454
    %v490 = vpop.f32.mrb[0].mxu0
    %v491 = vadd.f32 0.0, %v490
    %v492 = vpop.f32.mrb[0].mxu0
    %v493 = vadd.f32 0.0, %v492
    %v494 = vpop.f32.mrb[0].mxu0
    %v495 = vpop.f32.mrb[0].mxu0
    %496 = vdwg.mxu0
    %497 = vmatprep.subr.bf16.mxu0 %v165
    %498 = vmatpush1.bf16.msra.mxu0 %v164
    %499 = vmatprep.subr.bf16.mxu0 %v169
    %500 = vmatpush1.bf16.msra.mxu0 %v168
    %501 = vmatprep.subr.bf16.mxu0 %v173
    %502 = vmatpush1.bf16.msra.mxu0 %v172
    %503 = vmatprep.subr.bf16.mxu0 %v177
    %504 = vmatpush1.bf16.msra.mxu0 %v176
    %505 = vmatprep.subr.bf16.mxu0 0
    %506 = vmatpush1.bf16.msra.mxu0 0
    %507 = vmatprep.subr.bf16.mxu0 0
    %508 = vmatpush1.bf16.msra.mxu0 0
    %509 = vmatprep.subr.bf16.mxu0 0
    %510 = vmatpush1.bf16.msra.mxu0 0
    %511 = vmatprep.subr.bf16.mxu0 0
    %512 = vmatpush1.bf16.msra.mxu0 0
    %513 = vmatprep.subr.bf16.mxu0 0
    %514 = vmatpush1.bf16.msra.mxu0 0
    %515 = vmatprep.subr.bf16.mxu0 0
    %516 = vmatpush1.bf16.msra.mxu0 0
    %517 = vmatprep.subr.bf16.mxu0 0
    %518 = vmatpush1.bf16.msra.mxu0 0
    %519 = vmatprep.subr.bf16.mxu0 0
    %520 = vmatpush1.bf16.msra.mxu0 0
    %521 = vmatprep.subr.bf16.mxu0 0
    %522 = vmatpush1.bf16.msra.mxu0 0
    %523 = vmatprep.subr.bf16.mxu0 0
    %524 = vmatpush1.bf16.msra.mxu0 0
    %525 = vmatprep.subr.bf16.mxu0 0
    %526 = vmatpush1.bf16.msra.mxu0 0
    %527 = vmatprep.subr.bf16.mxu0 0
    %528 = vmatpush1.bf16.msra.mxu0 0
    %529 = vmatprep.mubr.bf16.mxu0 0
    %530 = vmatmul.mubr.bf16.gmra.mrb[0].mxu0 %v454
    %v531 = vpop.f32.mrb[0].mxu0
    %v532 = vadd.f32 0.0, %v531
    %v533 = vpop.f32.mrb[0].mxu0
    %v534 = vadd.f32 0.0, %v533
    %v535 = vpop.f32.mrb[0].mxu0
    %v536 = vpop.f32.mrb[0].mxu0
    %537 = vdwg.mxu0
    %v538 = vadd.f32 %v448, %v491
    %v539 = vadd.f32 %v449, %v493
    %v540 = vadd.f32 %v450, %v532
    %v541 = vadd.f32 %v451, %v534
    %v542 = vxor.u32 %v538, 2147483648
    %v543 = vmul.f32 %v542, 1.442695
    %v544 = vpow.pop %v543
    %v545 = vadd.f32 %v544, 1.0
    %v546 = vrcp.pop %v545
    %v547 = vmul.f32 1.0, %v546
    %v548 = vxor.u32 %v539, 2147483648
    %v549 = vmul.f32 %v548, 1.442695
    %v550 = vpow.pop %v549
    %v551 = vadd.f32 %v550, 1.0
    %v552 = vrcp.pop %v551
    %v553 = vmul.f32 1.0, %v552
    %v554 = vtanh.pop %v541
    %v555 = vmul.f32 %v553, %v428
    %v556 = vmul.f32 %v547, %v554
    %v557 = vadd.f32 %v555, %v556
    %v558 = vxor.u32 %v540, 2147483648
    %v559 = vmul.f32 %v558, 1.442695
    %v560 = vpow.pop %v559
    %v561 = vadd.f32 %v560, 1.0
    %v562 = vrcp.pop %v561
    %v563 = vmul.f32 1.0, %v562
    %v564 = vtanh.pop %v557
    %v565 = vmul.f32 %v563, %v564
    %s566 = scalar_lea.vmem %s0, 24
    %v567 = vld [vmem:[%s566] sm:$0xff]
    %569 = vset.pattern.permute.xlu0 0
    %570 = vperm.xlu0 %569, %v567
    %v571 = vpop.permute.xlu0 %570
    %v573 = vmul.f32 %v571, %v62
    %v574 = vmul.f32 %v571, %v66
    %v575 = vmul.f32 %v571, %v70
    %v576 = vmul.f32 %v571, %v74
    %v577 = vadd.f32 %v573, %v83
    %v578 = vadd.f32 %v574, %v87
    %v579 = vadd.f32 %v575, %v91
    %v580 = vadd.f32 %v576, %v95
    %v581 = vpack.c.bf16 %v565, %v565
    %v583 = vsel %vm194, %v581, 0
    %585 = vmatprep.subr.bf16.mxu0 %v163
    %586 = vmatpush1.bf16.msra.mxu0 %v162
    %587 = vmatprep.subr.bf16.mxu0 %v167
    %588 = vmatpush1.bf16.msra.mxu0 %v166
    %589 = vmatprep.subr.bf16.mxu0 %v171
    %590 = vmatpush1.bf16.msra.mxu0 %v170
    %591 = vmatprep.subr.bf16.mxu0 %v175
    %592 = vmatpush1.bf16.msra.mxu0 %v174
    %593 = vmatprep.subr.bf16.mxu0 0
    %594 = vmatpush1.bf16.msra.mxu0 0
    %595 = vmatprep.subr.bf16.mxu0 0
    %596 = vmatpush1.bf16.msra.mxu0 0
    %597 = vmatprep.subr.bf16.mxu0 0
    %598 = vmatpush1.bf16.msra.mxu0 0
    %599 = vmatprep.subr.bf16.mxu0 0
    %600 = vmatpush1.bf16.msra.mxu0 0
    %601 = vmatprep.subr.bf16.mxu0 0
    %602 = vmatpush1.bf16.msra.mxu0 0
    %603 = vmatprep.subr.bf16.mxu0 0
    %604 = vmatpush1.bf16.msra.mxu0 0
    %605 = vmatprep.subr.bf16.mxu0 0
    %606 = vmatpush1.bf16.msra.mxu0 0
    %607 = vmatprep.subr.bf16.mxu0 0
    %608 = vmatpush1.bf16.msra.mxu0 0
    %609 = vmatprep.subr.bf16.mxu0 0
    %610 = vmatpush1.bf16.msra.mxu0 0
    %611 = vmatprep.subr.bf16.mxu0 0
    %612 = vmatpush1.bf16.msra.mxu0 0
    %613 = vmatprep.subr.bf16.mxu0 0
    %614 = vmatpush1.bf16.msra.mxu0 0
    %615 = vmatprep.subr.bf16.mxu0 0
    %616 = vmatpush1.bf16.msra.mxu0 0
    %617 = vmatprep.mubr.bf16.mxu0 0
    %618 = vmatmul.mubr.bf16.gmra.mrb[0].mxu0 %v583
    %v619 = vpop.f32.mrb[0].mxu0
    %v620 = vadd.f32 0.0, %v619
    %v621 = vpop.f32.mrb[0].mxu0
    %v622 = vadd.f32 0.0, %v621
    %v623 = vpop.f32.mrb[0].mxu0
    %v624 = vpop.f32.mrb[0].mxu0
    %625 = vdwg.mxu0
    %626 = vmatprep.subr.bf16.mxu0 %v165
    %627 = vmatpush1.bf16.msra.mxu0 %v164
    %628 = vmatprep.subr.bf16.mxu0 %v169
    %629 = vmatpush1.bf16.msra.mxu0 %v168
    %630 = vmatprep.subr.bf16.mxu0 %v173
    %631 = vmatpush1.bf16.msra.mxu0 %v172
    %632 = vmatprep.subr.bf16.mxu0 %v177
    %633 = vmatpush1.bf16.msra.mxu0 %v176
    %634 = vmatprep.subr.bf16.mxu0 0
    %635 = vmatpush1.bf16.msra.mxu0 0
    %636 = vmatprep.subr.bf16.mxu0 0
    %637 = vmatpush1.bf16.msra.mxu0 0
    %638 = vmatprep.subr.bf16.mxu0 0
    %639 = vmatpush1.bf16.msra.mxu0 0
    %640 = vmatprep.subr.bf16.mxu0 0
    %641 = vmatpush1.bf16.msra.mxu0 0
    %642 = vmatprep.subr.bf16.mxu0 0
    %643 = vmatpush1.bf16.msra.mxu0 0
    %644 = vmatprep.subr.bf16.mxu0 0
    %645 = vmatpush1.bf16.msra.mxu0 0
    %646 = vmatprep.subr.bf16.mxu0 0
    %647 = vmatpush1.bf16.msra.mxu0 0
    %648 = vmatprep.subr.bf16.mxu0 0
    %649 = vmatpush1.bf16.msra.mxu0 0
    %650 = vmatprep.subr.bf16.mxu0 0
    %651 = vmatpush1.bf16.msra.mxu0 0
    %652 = vmatprep.subr.bf16.mxu0 0
    %653 = vmatpush1.bf16.msra.mxu0 0
    %654 = vmatprep.subr.bf16.mxu0 0
    %655 = vmatpush1.bf16.msra.mxu0 0
    %656 = vmatprep.subr.bf16.mxu0 0
    %657 = vmatpush1.bf16.msra.mxu0 0
    %658 = vmatprep.mubr.bf16.mxu0 0
    %659 = vmatmul.mubr.bf16.gmra.mrb[0].mxu0 %v583
    %v660 = vpop.f32.mrb[0].mxu0
    %v661 = vadd.f32 0.0, %v660
    %v662 = vpop.f32.mrb[0].mxu0
    %v663 = vadd.f32 0.0, %v662
    %v664 = vpop.f32.mrb[0].mxu0
    %v665 = vpop.f32.mrb[0].mxu0
    %666 = vdwg.mxu0
    %v667 = vadd.f32 %v577, %v620
    %v668 = vadd.f32 %v578, %v622
    %v669 = vadd.f32 %v579, %v661
    %v670 = vadd.f32 %v580, %v663
    %v671 = vxor.u32 %v667, 2147483648
    %v672 = vmul.f32 %v671, 1.442695
    %v673 = vpow.pop %v672
    %v674 = vadd.f32 %v673, 1.0
    %v675 = vrcp.pop %v674
    %v676 = vmul.f32 1.0, %v675
    %v677 = vxor.u32 %v668, 2147483648
    %v678 = vmul.f32 %v677, 1.442695
    %v679 = vpow.pop %v678
    %v680 = vadd.f32 %v679, 1.0
    %v681 = vrcp.pop %v680
    %v682 = vmul.f32 1.0, %v681
    %v683 = vtanh.pop %v670
    %v684 = vmul.f32 %v682, %v557
    %v685 = vmul.f32 %v676, %v683
    %v686 = vadd.f32 %v684, %v685
    %v687 = vxor.u32 %v669, 2147483648
    %v688 = vmul.f32 %v687, 1.442695
    %v689 = vpow.pop %v688
    %v690 = vadd.f32 %v689, 1.0
    %v691 = vrcp.pop %v690
    %v692 = vmul.f32 1.0, %v691
    %v693 = vtanh.pop %v686
    %v694 = vmul.f32 %v692, %v693
    %s695 = scalar_lea.vmem %s0, 32
    %v696 = vld [vmem:[%s695] sm:$0xff]
    %698 = vset.pattern.permute.xlu0 0
    %699 = vperm.xlu0 %698, %v696
    %v700 = vpop.permute.xlu0 %699
    %v702 = vmul.f32 %v700, %v62
    %v703 = vmul.f32 %v700, %v66
    %v704 = vmul.f32 %v700, %v70
    %v705 = vmul.f32 %v700, %v74
    %v706 = vadd.f32 %v702, %v83
    %v707 = vadd.f32 %v703, %v87
    %v708 = vadd.f32 %v704, %v91
    %v709 = vadd.f32 %v705, %v95
    %v710 = vpack.c.bf16 %v694, %v694
    %v712 = vsel %vm194, %v710, 0
    %714 = vmatprep.subr.bf16.mxu0 %v163
    %715 = vmatpush1.bf16.msra.mxu0 %v162
    %716 = vmatprep.subr.bf16.mxu0 %v167
    %717 = vmatpush1.bf16.msra.mxu0 %v166
    %718 = vmatprep.subr.bf16.mxu0 %v171
    %719 = vmatpush1.bf16.msra.mxu0 %v170
    %720 = vmatprep.subr.bf16.mxu0 %v175
    %721 = vmatpush1.bf16.msra.mxu0 %v174
    %722 = vmatprep.subr.bf16.mxu0 0
    %723 = vmatpush1.bf16.msra.mxu0 0
    %724 = vmatprep.subr.bf16.mxu0 0
    %725 = vmatpush1.bf16.msra.mxu0 0
    %726 = vmatprep.subr.bf16.mxu0 0
    %727 = vmatpush1.bf16.msra.mxu0 0
    %728 = vmatprep.subr.bf16.mxu0 0
    %729 = vmatpush1.bf16.msra.mxu0 0
    %730 = vmatprep.subr.bf16.mxu0 0
    %731 = vmatpush1.bf16.msra.mxu0 0
    %732 = vmatprep.subr.bf16.mxu0 0
    %733 = vmatpush1.bf16.msra.mxu0 0
    %734 = vmatprep.subr.bf16.mxu0 0
    %735 = vmatpush1.bf16.msra.mxu0 0
    %736 = vmatprep.subr.bf16.mxu0 0
    %737 = vmatpush1.bf16.msra.mxu0 0
    %738 = vmatprep.subr.bf16.mxu0 0
    %739 = vmatpush1.bf16.msra.mxu0 0
    %740 = vmatprep.subr.bf16.mxu0 0
    %741 = vmatpush1.bf16.msra.mxu0 0
    %742 = vmatprep.subr.bf16.mxu0 0
    %743 = vmatpush1.bf16.msra.mxu0 0
    %744 = vmatprep.subr.bf16.mxu0 0
    %745 = vmatpush1.bf16.msra.mxu0 0
    %746 = vmatprep.mubr.bf16.mxu0 0
    %747 = vmatmul.mubr.bf16.gmra.mrb[0].mxu0 %v712
    %v748 = vpop.f32.mrb[0].mxu0
    %v749 = vadd.f32 0.0, %v748
    %v750 = vpop.f32.mrb[0].mxu0
    %v751 = vadd.f32 0.0, %v750
    %v752 = vpop.f32.mrb[0].mxu0
    %v753 = vpop.f32.mrb[0].mxu0
    %754 = vdwg.mxu0
    %755 = vmatprep.subr.bf16.mxu0 %v165
    %756 = vmatpush1.bf16.msra.mxu0 %v164
    %757 = vmatprep.subr.bf16.mxu0 %v169
    %758 = vmatpush1.bf16.msra.mxu0 %v168
    %759 = vmatprep.subr.bf16.mxu0 %v173
    %760 = vmatpush1.bf16.msra.mxu0 %v172
    %761 = vmatprep.subr.bf16.mxu0 %v177
    %762 = vmatpush1.bf16.msra.mxu0 %v176
    %763 = vmatprep.subr.bf16.mxu0 0
    %764 = vmatpush1.bf16.msra.mxu0 0
    %765 = vmatprep.subr.bf16.mxu0 0
    %766 = vmatpush1.bf16.msra.mxu0 0
    %767 = vmatprep.subr.bf16.mxu0 0
    %768 = vmatpush1.bf16.msra.mxu0 0
    %769 = vmatprep.subr.bf16.mxu0 0
    %770 = vmatpush1.bf16.msra.mxu0 0
    %771 = vmatprep.subr.bf16.mxu0 0
    %772 = vmatpush1.bf16.msra.mxu0 0
    %773 = vmatprep.subr.bf16.mxu0 0
    %774 = vmatpush1.bf16.msra.mxu0 0
    %775 = vmatprep.subr.bf16.mxu0 0
    %776 = vmatpush1.bf16.msra.mxu0 0
    %777 = vmatprep.subr.bf16.mxu0 0
    %778 = vmatpush1.bf16.msra.mxu0 0
    %779 = vmatprep.subr.bf16.mxu0 0
    %780 = vmatpush1.bf16.msra.mxu0 0
    %781 = vmatprep.subr.bf16.mxu0 0
    %782 = vmatpush1.bf16.msra.mxu0 0
    %783 = vmatprep.subr.bf16.mxu0 0
    %784 = vmatpush1.bf16.msra.mxu0 0
    %785 = vmatprep.subr.bf16.mxu0 0
    %786 = vmatpush1.bf16.msra.mxu0 0
    %787 = vmatprep.mubr.bf16.mxu0 0
    %788 = vmatmul.mubr.bf16.gmra.mrb[0].mxu0 %v712
    %v789 = vpop.f32.mrb[0].mxu0
    %v790 = vadd.f32 0.0, %v789
    %v791 = vpop.f32.mrb[0].mxu0
    %v792 = vadd.f32 0.0, %v791
    %v793 = vpop.f32.mrb[0].mxu0
    %v794 = vpop.f32.mrb[0].mxu0
    %795 = vdwg.mxu0
    %v796 = vadd.f32 %v706, %v749
    %v797 = vadd.f32 %v707, %v751
    %v798 = vadd.f32 %v708, %v790
    %v799 = vadd.f32 %v709, %v792
    %v800 = vxor.u32 %v796, 2147483648
    %v801 = vmul.f32 %v800, 1.442695
    %v802 = vpow.pop %v801
    %v803 = vadd.f32 %v802, 1.0
    %v804 = vrcp.pop %v803
    %v805 = vmul.f32 1.0, %v804
    %v806 = vxor.u32 %v797, 2147483648
    %v807 = vmul.f32 %v806, 1.442695
    %v808 = vpow.pop %v807
    %v809 = vadd.f32 %v808, 1.0
    %v810 = vrcp.pop %v809
    %v811 = vmul.f32 1.0, %v810
    %v812 = vtanh.pop %v799
    %v813 = vmul.f32 %v811, %v686
    %v814 = vmul.f32 %v805, %v812
    %v815 = vadd.f32 %v813, %v814
    %v816 = vxor.u32 %v798, 2147483648
    %v817 = vmul.f32 %v816, 1.442695
    %v818 = vpow.pop %v817
    %v819 = vadd.f32 %v818, 1.0
    %v820 = vrcp.pop %v819
    %v821 = vmul.f32 1.0, %v820
    %v822 = vtanh.pop %v815
    %v823 = vmul.f32 %v821, %v822
    %s824 = scalar_lea.vmem %s0, 40
    %v825 = vld [vmem:[%s824] sm:$0xff]
    %827 = vset.pattern.permute.xlu0 0
    %828 = vperm.xlu0 %827, %v825
    %v829 = vpop.permute.xlu0 %828
    %v831 = vmul.f32 %v829, %v62
    %v832 = vmul.f32 %v829, %v66
    %v833 = vmul.f32 %v829, %v70
    %v834 = vmul.f32 %v829, %v74
    %v835 = vadd.f32 %v831, %v83
    %v836 = vadd.f32 %v832, %v87
    %v837 = vadd.f32 %v833, %v91
    %v838 = vadd.f32 %v834, %v95
    %v839 = vpack.c.bf16 %v823, %v823
    %v841 = vsel %vm194, %v839, 0
    %843 = vmatprep.subr.bf16.mxu0 %v163
    %844 = vmatpush1.bf16.msra.mxu0 %v162
    %845 = vmatprep.subr.bf16.mxu0 %v167
    %846 = vmatpush1.bf16.msra.mxu0 %v166
    %847 = vmatprep.subr.bf16.mxu0 %v171
    %848 = vmatpush1.bf16.msra.mxu0 %v170
    %849 = vmatprep.subr.bf16.mxu0 %v175
    %850 = vmatpush1.bf16.msra.mxu0 %v174
    %851 = vmatprep.subr.bf16.mxu0 0
    %852 = vmatpush1.bf16.msra.mxu0 0
    %853 = vmatprep.subr.bf16.mxu0 0
    %854 = vmatpush1.bf16.msra.mxu0 0
    %855 = vmatprep.subr.bf16.mxu0 0
    %856 = vmatpush1.bf16.msra.mxu0 0
    %857 = vmatprep.subr.bf16.mxu0 0
    %858 = vmatpush1.bf16.msra.mxu0 0
    %859 = vmatprep.subr.bf16.mxu0 0
    %860 = vmatpush1.bf16.msra.mxu0 0
    %861 = vmatprep.subr.bf16.mxu0 0
    %862 = vmatpush1.bf16.msra.mxu0 0
    %863 = vmatprep.subr.bf16.mxu0 0
    %864 = vmatpush1.bf16.msra.mxu0 0
    %865 = vmatprep.subr.bf16.mxu0 0
    %866 = vmatpush1.bf16.msra.mxu0 0
    %867 = vmatprep.subr.bf16.mxu0 0
    %868 = vmatpush1.bf16.msra.mxu0 0
    %869 = vmatprep.subr.bf16.mxu0 0
    %870 = vmatpush1.bf16.msra.mxu0 0
    %871 = vmatprep.subr.bf16.mxu0 0
    %872 = vmatpush1.bf16.msra.mxu0 0
    %873 = vmatprep.subr.bf16.mxu0 0
    %874 = vmatpush1.bf16.msra.mxu0 0
    %875 = vmatprep.mubr.bf16.mxu0 0
    %876 = vmatmul.mubr.bf16.gmra.mrb[0].mxu0 %v841
    %v877 = vpop.f32.mrb[0].mxu0
    %v878 = vadd.f32 0.0, %v877
    %v879 = vpop.f32.mrb[0].mxu0
    %v880 = vadd.f32 0.0, %v879
    %v881 = vpop.f32.mrb[0].mxu0
    %v882 = vpop.f32.mrb[0].mxu0
    %883 = vdwg.mxu0
    %884 = vmatprep.subr.bf16.mxu0 %v165
    %885 = vmatpush1.bf16.msra.mxu0 %v164
    %886 = vmatprep.subr.bf16.mxu0 %v169
    %887 = vmatpush1.bf16.msra.mxu0 %v168
    %888 = vmatprep.subr.bf16.mxu0 %v173
    %889 = vmatpush1.bf16.msra.mxu0 %v172
    %890 = vmatprep.subr.bf16.mxu0 %v177
    %891 = vmatpush1.bf16.msra.mxu0 %v176
    %892 = vmatprep.subr.bf16.mxu0 0
    %893 = vmatpush1.bf16.msra.mxu0 0
    %894 = vmatprep.subr.bf16.mxu0 0
    %895 = vmatpush1.bf16.msra.mxu0 0
    %896 = vmatprep.subr.bf16.mxu0 0
    %897 = vmatpush1.bf16.msra.mxu0 0
    %898 = vmatprep.subr.bf16.mxu0 0
    %899 = vmatpush1.bf16.msra.mxu0 0
    %900 = vmatprep.subr.bf16.mxu0 0
    %901 = vmatpush1.bf16.msra.mxu0 0
    %902 = vmatprep.subr.bf16.mxu0 0
    %903 = vmatpush1.bf16.msra.mxu0 0
    %904 = vmatprep.subr.bf16.mxu0 0
    %905 = vmatpush1.bf16.msra.mxu0 0
    %906 = vmatprep.subr.bf16.mxu0 0
    %907 = vmatpush1.bf16.msra.mxu0 0
    %908 = vmatprep.subr.bf16.mxu0 0
    %909 = vmatpush1.bf16.msra.mxu0 0
    %910 = vmatprep.subr.bf16.mxu0 0
    %911 = vmatpush1.bf16.msra.mxu0 0
    %912 = vmatprep.subr.bf16.mxu0 0
    %913 = vmatpush1.bf16.msra.mxu0 0
    %914 = vmatprep.subr.bf16.mxu0 0
    %915 = vmatpush1.bf16.msra.mxu0 0
    %916 = vmatprep.mubr.bf16.mxu0 0
    %917 = vmatmul.mubr.bf16.gmra.mrb[0].mxu0 %v841
    %v918 = vpop.f32.mrb[0].mxu0
    %v919 = vadd.f32 0.0, %v918
    %v920 = vpop.f32.mrb[0].mxu0
    %v921 = vadd.f32 0.0, %v920
    %v922 = vpop.f32.mrb[0].mxu0
    %v923 = vpop.f32.mrb[0].mxu0
    %924 = vdwg.mxu0
    %v925 = vadd.f32 %v835, %v878
    %v926 = vadd.f32 %v836, %v880
    %v927 = vadd.f32 %v837, %v919
    %v928 = vadd.f32 %v838, %v921
    %v929 = vxor.u32 %v925, 2147483648
    %v930 = vmul.f32 %v929, 1.442695
    %v931 = vpow.pop %v930
    %v932 = vadd.f32 %v931, 1.0
    %v933 = vrcp.pop %v932
    %v934 = vmul.f32 1.0, %v933
    %v935 = vxor.u32 %v926, 2147483648
    %v936 = vmul.f32 %v935, 1.442695
    %v937 = vpow.pop %v936
    %v938 = vadd.f32 %v937, 1.0
    %v939 = vrcp.pop %v938
    %v940 = vmul.f32 1.0, %v939
    %v941 = vtanh.pop %v928
    %v942 = vmul.f32 %v940, %v815
    %v943 = vmul.f32 %v934, %v941
    %v944 = vadd.f32 %v942, %v943
    %v945 = vxor.u32 %v927, 2147483648
    %v946 = vmul.f32 %v945, 1.442695
    %v947 = vpow.pop %v946
    %v948 = vadd.f32 %v947, 1.0
    %v949 = vrcp.pop %v948
    %v950 = vmul.f32 1.0, %v949
    %v951 = vtanh.pop %v944
    %v952 = vmul.f32 %v950, %v951
    %s953 = scalar_lea.vmem %s0, 48
    %v954 = vld [vmem:[%s953] sm:$0xff]
    %956 = vset.pattern.permute.xlu0 0
    %957 = vperm.xlu0 %956, %v954
    %v958 = vpop.permute.xlu0 %957
    %v960 = vmul.f32 %v958, %v62
    %v961 = vmul.f32 %v958, %v66
    %v962 = vmul.f32 %v958, %v70
    %v963 = vmul.f32 %v958, %v74
    %v964 = vadd.f32 %v960, %v83
    %v965 = vadd.f32 %v961, %v87
    %v966 = vadd.f32 %v962, %v91
    %v967 = vadd.f32 %v963, %v95
    %v968 = vpack.c.bf16 %v952, %v952
    %v970 = vsel %vm194, %v968, 0
    %972 = vmatprep.subr.bf16.mxu0 %v163
    %973 = vmatpush1.bf16.msra.mxu0 %v162
    %974 = vmatprep.subr.bf16.mxu0 %v167
    %975 = vmatpush1.bf16.msra.mxu0 %v166
    %976 = vmatprep.subr.bf16.mxu0 %v171
    %977 = vmatpush1.bf16.msra.mxu0 %v170
    %978 = vmatprep.subr.bf16.mxu0 %v175
    %979 = vmatpush1.bf16.msra.mxu0 %v174
    %980 = vmatprep.subr.bf16.mxu0 0
    %981 = vmatpush1.bf16.msra.mxu0 0
    %982 = vmatprep.subr.bf16.mxu0 0
    %983 = vmatpush1.bf16.msra.mxu0 0
    %984 = vmatprep.subr.bf16.mxu0 0
    %985 = vmatpush1.bf16.msra.mxu0 0
    %986 = vmatprep.subr.bf16.mxu0 0
    %987 = vmatpush1.bf16.msra.mxu0 0
    %988 = vmatprep.subr.bf16.mxu0 0
    %989 = vmatpush1.bf16.msra.mxu0 0
    %990 = vmatprep.subr.bf16.mxu0 0
    %991 = vmatpush1.bf16.msra.mxu0 0
    %992 = vmatprep.subr.bf16.mxu0 0
    %993 = vmatpush1.bf16.msra.mxu0 0
    %994 = vmatprep.subr.bf16.mxu0 0
    %995 = vmatpush1.bf16.msra.mxu0 0
    %996 = vmatprep.subr.bf16.mxu0 0
    %997 = vmatpush1.bf16.msra.mxu0 0
    %998 = vmatprep.subr.bf16.mxu0 0
    %999 = vmatpush1.bf16.msra.mxu0 0
    %1000 = vmatprep.subr.bf16.mxu0 0
    %1001 = vmatpush1.bf16.msra.mxu0 0
    %1002 = vmatprep.subr.bf16.mxu0 0
    %1003 = vmatpush1.bf16.msra.mxu0 0
    %1004 = vmatprep.mubr.bf16.mxu0 0
    %1005 = vmatmul.mubr.bf16.gmra.mrb[0].mxu0 %v970
    %v1006 = vpop.f32.mrb[0].mxu0
    %v1007 = vadd.f32 0.0, %v1006
    %v1008 = vpop.f32.mrb[0].mxu0
    %v1009 = vadd.f32 0.0, %v1008
    %v1010 = vpop.f32.mrb[0].mxu0
    %v1011 = vpop.f32.mrb[0].mxu0
    %1012 = vdwg.mxu0
    %1013 = vmatprep.subr.bf16.mxu0 %v165
    %1014 = vmatpush1.bf16.msra.mxu0 %v164
    %1015 = vmatprep.subr.bf16.mxu0 %v169
    %1016 = vmatpush1.bf16.msra.mxu0 %v168
    %1017 = vmatprep.subr.bf16.mxu0 %v173
    %1018 = vmatpush1.bf16.msra.mxu0 %v172
    %1019 = vmatprep.subr.bf16.mxu0 %v177
    %1020 = vmatpush1.bf16.msra.mxu0 %v176
    %1021 = vmatprep.subr.bf16.mxu0 0
    %1022 = vmatpush1.bf16.msra.mxu0 0
    %1023 = vmatprep.subr.bf16.mxu0 0
    %1024 = vmatpush1.bf16.msra.mxu0 0
    %1025 = vmatprep.subr.bf16.mxu0 0
    %1026 = vmatpush1.bf16.msra.mxu0 0
    %1027 = vmatprep.subr.bf16.mxu0 0
    %1028 = vmatpush1.bf16.msra.mxu0 0
    %1029 = vmatprep.subr.bf16.mxu0 0
    %1030 = vmatpush1.bf16.msra.mxu0 0
    %1031 = vmatprep.subr.bf16.mxu0 0
    %1032 = vmatpush1.bf16.msra.mxu0 0
    %1033 = vmatprep.subr.bf16.mxu0 0
    %1034 = vmatpush1.bf16.msra.mxu0 0
    %1035 = vmatprep.subr.bf16.mxu0 0
    %1036 = vmatpush1.bf16.msra.mxu0 0
    %1037 = vmatprep.subr.bf16.mxu0 0
    %1038 = vmatpush1.bf16.msra.mxu0 0
    %1039 = vmatprep.subr.bf16.mxu0 0
    %1040 = vmatpush1.bf16.msra.mxu0 0
    %1041 = vmatprep.subr.bf16.mxu0 0
    %1042 = vmatpush1.bf16.msra.mxu0 0
    %1043 = vmatprep.subr.bf16.mxu0 0
    %1044 = vmatpush1.bf16.msra.mxu0 0
    %1045 = vmatprep.mubr.bf16.mxu0 0
    %1046 = vmatmul.mubr.bf16.gmra.mrb[0].mxu0 %v970
    %v1047 = vpop.f32.mrb[0].mxu0
    %v1048 = vadd.f32 0.0, %v1047
    %v1049 = vpop.f32.mrb[0].mxu0
    %v1050 = vadd.f32 0.0, %v1049
    %v1051 = vpop.f32.mrb[0].mxu0
    %v1052 = vpop.f32.mrb[0].mxu0
    %1053 = vdwg.mxu0
    %v1054 = vadd.f32 %v964, %v1007
    %v1055 = vadd.f32 %v965, %v1009
    %v1056 = vadd.f32 %v966, %v1048
    %v1057 = vadd.f32 %v967, %v1050
    %v1058 = vxor.u32 %v1054, 2147483648
    %v1059 = vmul.f32 %v1058, 1.442695
    %v1060 = vpow.pop %v1059
    %v1061 = vadd.f32 %v1060, 1.0
    %v1062 = vrcp.pop %v1061
    %v1063 = vmul.f32 1.0, %v1062
    %v1064 = vxor.u32 %v1055, 2147483648
    %v1065 = vmul.f32 %v1064, 1.442695
    %v1066 = vpow.pop %v1065
    %v1067 = vadd.f32 %v1066, 1.0
    %v1068 = vrcp.pop %v1067
    %v1069 = vmul.f32 1.0, %v1068
    %v1070 = vtanh.pop %v1057
    %v1071 = vmul.f32 %v1069, %v944
    %v1072 = vmul.f32 %v1063, %v1070
    %v1073 = vadd.f32 %v1071, %v1072
    %v1074 = vxor.u32 %v1056, 2147483648
    %v1075 = vmul.f32 %v1074, 1.442695
    %v1076 = vpow.pop %v1075
    %v1077 = vadd.f32 %v1076, 1.0
    %v1078 = vrcp.pop %v1077
    %v1079 = vmul.f32 1.0, %v1078
    %v1080 = vtanh.pop %v1073
    %v1081 = vmul.f32 %v1079, %v1080
    %s1082 = scalar_lea.vmem %s0, 56
    %v1083 = vld [vmem:[%s1082] sm:$0xff]
    %1085 = vset.pattern.permute.xlu0 0
    %1086 = vperm.xlu0 %1085, %v1083
    %v1087 = vpop.permute.xlu0 %1086
    %v1089 = vmul.f32 %v1087, %v62
    %v1090 = vmul.f32 %v1087, %v66
    %v1091 = vmul.f32 %v1087, %v70
    %v1092 = vmul.f32 %v1087, %v74
    %v1093 = vadd.f32 %v1089, %v83
    %v1094 = vadd.f32 %v1090, %v87
    %v1095 = vadd.f32 %v1091, %v91
    %v1096 = vadd.f32 %v1092, %v95
    %v1097 = vpack.c.bf16 %v1081, %v1081
    %v1099 = vsel %vm194, %v1097, 0
    %1101 = vmatprep.subr.bf16.mxu0 %v163
    %1102 = vmatpush1.bf16.msra.mxu0 %v162
    %1103 = vmatprep.subr.bf16.mxu0 %v167
    %1104 = vmatpush1.bf16.msra.mxu0 %v166
    %1105 = vmatprep.subr.bf16.mxu0 %v171
    %1106 = vmatpush1.bf16.msra.mxu0 %v170
    %1107 = vmatprep.subr.bf16.mxu0 %v175
    %1108 = vmatpush1.bf16.msra.mxu0 %v174
    %1109 = vmatprep.subr.bf16.mxu0 0
    %1110 = vmatpush1.bf16.msra.mxu0 0
    %1111 = vmatprep.subr.bf16.mxu0 0
    %1112 = vmatpush1.bf16.msra.mxu0 0
    %1113 = vmatprep.subr.bf16.mxu0 0
    %1114 = vmatpush1.bf16.msra.mxu0 0
    %1115 = vmatprep.subr.bf16.mxu0 0
    %1116 = vmatpush1.bf16.msra.mxu0 0
    %1117 = vmatprep.subr.bf16.mxu0 0
    %1118 = vmatpush1.bf16.msra.mxu0 0
    %1119 = vmatprep.subr.bf16.mxu0 0
    %1120 = vmatpush1.bf16.msra.mxu0 0
    %1121 = vmatprep.subr.bf16.mxu0 0
    %1122 = vmatpush1.bf16.msra.mxu0 0
    %1123 = vmatprep.subr.bf16.mxu0 0
    %1124 = vmatpush1.bf16.msra.mxu0 0
    %1125 = vmatprep.subr.bf16.mxu0 0
    %1126 = vmatpush1.bf16.msra.mxu0 0
    %1127 = vmatprep.subr.bf16.mxu0 0
    %1128 = vmatpush1.bf16.msra.mxu0 0
    %1129 = vmatprep.subr.bf16.mxu0 0
    %1130 = vmatpush1.bf16.msra.mxu0 0
    %1131 = vmatprep.subr.bf16.mxu0 0
    %1132 = vmatpush1.bf16.msra.mxu0 0
    %1133 = vmatprep.mubr.bf16.mxu0 0
    %1134 = vmatmul.mubr.bf16.gmra.mrb[0].mxu0 %v1099
    %v1135 = vpop.f32.mrb[0].mxu0
    %v1136 = vadd.f32 0.0, %v1135
    %v1137 = vpop.f32.mrb[0].mxu0
    %v1138 = vadd.f32 0.0, %v1137
    %v1139 = vpop.f32.mrb[0].mxu0
    %v1140 = vpop.f32.mrb[0].mxu0
    %1141 = vdwg.mxu0
    %1142 = vmatprep.subr.bf16.mxu0 %v165
    %1143 = vmatpush1.bf16.msra.mxu0 %v164
    %1144 = vmatprep.subr.bf16.mxu0 %v169
    %1145 = vmatpush1.bf16.msra.mxu0 %v168
    %1146 = vmatprep.subr.bf16.mxu0 %v173
    %1147 = vmatpush1.bf16.msra.mxu0 %v172
    %1148 = vmatprep.subr.bf16.mxu0 %v177
    %1149 = vmatpush1.bf16.msra.mxu0 %v176
    %1150 = vmatprep.subr.bf16.mxu0 0
    %1151 = vmatpush1.bf16.msra.mxu0 0
    %1152 = vmatprep.subr.bf16.mxu0 0
    %1153 = vmatpush1.bf16.msra.mxu0 0
    %1154 = vmatprep.subr.bf16.mxu0 0
    %1155 = vmatpush1.bf16.msra.mxu0 0
    %1156 = vmatprep.subr.bf16.mxu0 0
    %1157 = vmatpush1.bf16.msra.mxu0 0
    %1158 = vmatprep.subr.bf16.mxu0 0
    %1159 = vmatpush1.bf16.msra.mxu0 0
    %1160 = vmatprep.subr.bf16.mxu0 0
    %1161 = vmatpush1.bf16.msra.mxu0 0
    %1162 = vmatprep.subr.bf16.mxu0 0
    %1163 = vmatpush1.bf16.msra.mxu0 0
    %1164 = vmatprep.subr.bf16.mxu0 0
    %1165 = vmatpush1.bf16.msra.mxu0 0
    %1166 = vmatprep.subr.bf16.mxu0 0
    %1167 = vmatpush1.bf16.msra.mxu0 0
    %1168 = vmatprep.subr.bf16.mxu0 0
    %1169 = vmatpush1.bf16.msra.mxu0 0
    %1170 = vmatprep.subr.bf16.mxu0 0
    %1171 = vmatpush1.bf16.msra.mxu0 0
    %1172 = vmatprep.subr.bf16.mxu0 0
    %1173 = vmatpush1.bf16.msra.mxu0 0
    %1174 = vmatprep.mubr.bf16.mxu0 0
    %1175 = vmatmul.mubr.bf16.gmra.mrb[0].mxu0 %v1099
    %v1176 = vpop.f32.mrb[0].mxu0
    %v1177 = vadd.f32 0.0, %v1176
    %v1178 = vpop.f32.mrb[0].mxu0
    %v1179 = vadd.f32 0.0, %v1178
    %v1180 = vpop.f32.mrb[0].mxu0
    %v1181 = vpop.f32.mrb[0].mxu0
    %1182 = vdwg.mxu0
    %v1183 = vadd.f32 %v1093, %v1136
    %v1184 = vadd.f32 %v1094, %v1138
    %v1185 = vadd.f32 %v1095, %v1177
    %v1186 = vadd.f32 %v1096, %v1179
    %v1187 = vxor.u32 %v1183, 2147483648
    %v1188 = vmul.f32 %v1187, 1.442695
    %v1189 = vpow.pop %v1188
    %v1190 = vadd.f32 %v1189, 1.0
    %v1191 = vrcp.pop %v1190
    %v1192 = vmul.f32 1.0, %v1191
    %v1193 = vxor.u32 %v1184, 2147483648
    %v1194 = vmul.f32 %v1193, 1.442695
    %v1195 = vpow.pop %v1194
    %v1196 = vadd.f32 %v1195, 1.0
    %v1197 = vrcp.pop %v1196
    %v1198 = vmul.f32 1.0, %v1197
    %v1199 = vtanh.pop %v1186
    %v1200 = vmul.f32 %v1198, %v1073
    %v1201 = vmul.f32 %v1192, %v1199
    %v1202 = vadd.f32 %v1200, %v1201
    %v1203 = vxor.u32 %v1185, 2147483648
    %v1204 = vmul.f32 %v1203, 1.442695
    %v1205 = vpow.pop %v1204
    %v1206 = vadd.f32 %v1205, 1.0
    %v1207 = vrcp.pop %v1206
    %v1208 = vmul.f32 1.0, %v1207
    %v1209 = vtanh.pop %v1202
    %v1210 = vmul.f32 %v1208, %v1209
    %v1211 = vld [vmem:[%s4] sm:$0x1]
    %v1213 = vlaneseq
    %v1214 = vshrl.u32 %v1213, 7
    %v1215 = vsub.s32 0, %v1214
    %v1216 = vrot.slane %v1211, %v1215
    %v1218 = vmul.f32 %v1210, %v1216
    %v1219 = vsel %vm194, %v1218, 0.0
    %1220 = vadd.xlane.f32.xlu0 %v1219
    %v1221 = vpop.xlane.xlu0 %1220
    %v1222 = vld [vmem:[#allocation2] sm:$0x1]
    %v1224 = vlaneseq
    %v1225 = vshrl.u32 %v1224, 7
    %v1226 = vsub.s32 0, %v1225
    %v1227 = vrot.slane %v1222, %v1226
    %v1229 = vadd.f32 %v1221, %v1227
    %vm1230 = vcmask 7168
    %1231 = vst.msk [vmem:[%s6] sm:$0xff] %vm1230, %v1229
    // Predicated region
    $region30: #{tpu_custom_call.1} parent=1 // pred_check
      _
    $region31: #{tpu_custom_call.1} parent=1 // pred_check_branch
      %1233 = sbr.rel (0) target = $region33
    $region32: #{tpu_custom_call.1} parent=1 // pred_region
      _
    $region33: #{tpu_custom_call.1} parent=1 // pred_fallthru
      _
    // Predicated region
    $region34: #{tpu_custom_call.1} parent=1 // pred_check
      _
    $region35: #{tpu_custom_call.1} parent=1 // pred_check_branch
      %1235 = sbr.rel (0) target = $region37
    $region36: #{tpu_custom_call.1} parent=1 // pred_region
      _
    $region37: #{tpu_custom_call.1} parent=1 // pred_fallthru
      _
    %1236 = vsyncpa [#allocation4], 1

</llo_original>
